<compile_context>
chip_gen: v7x
topology: tpu7x:2x2x1
jax: 0.10.0
libtpu: 0.0.40
codegen_flags: <defaults>
</compile_context>

<pallas_src>
import functools

import jax
import jax.numpy as jnp
from jax import lax
from jax.experimental import pallas as pl
from jax.experimental.pallas import tpu as pltpu
import numpy as np

_PAD = 8  # interior columns of the expanded-activation scratch start here (8-aligned)


# ---------------------------------------------------------------------------
# Fused Pallas kernel: one (image, row-band) step of the inverted-residual block
# ---------------------------------------------------------------------------

def _fused_block_kernel(x_ref, w1_ref, b1_ref, w2_ref, b2_ref, w3_ref, b3_ref,
                        o_ref, h1p, *, W, TH, stride, shortcut):
    """x_ref: (1, (H+2)*W, Cin) whole zero-row-padded image (VMEM resident);
    w1: (Cin, c); w2: (9, c); w3: (c, Cout); b*: (1, ch) (BN already folded);
    o_ref: (1, THo*Wo, Cout) output rows of this band;
    h1p: VMEM scratch (TH+2, _PAD+W+1, c) = expanded activation band + 1 halo
    row top/bottom + 1 halo column each side (interior 8-aligned)."""
    f32 = jnp.float32
    c = w1_ref.shape[1]
    r = pl.program_id(1)
    nbands = pl.num_programs(1)
    Wo = W // stride
    THo = TH // stride

    # ---- stage 1: 1x1 expansion + folded BN + relu6 over TH+2 rows ---------
    start = pl.multiple_of(r * (TH * W), TH * W)
    xb = x_ref[0, pl.ds(start, (TH + 2) * W), :].astype(f32)     # ((TH+2)*W, Cin)
    y1 = jnp.dot(xb, w1_ref[...].astype(f32), preferred_element_type=f32)
    y1 = jnp.clip(y1 + b1_ref[...], 0.0, 6.0)
    # sublane-aligned interior store (columns [_PAD, _PAD+W))
    h1p[:, _PAD:_PAD + W, :] = y1.reshape(TH + 2, W, c)

    # Zero the halo ROWS only at the true image edges: the zero-padded input
    # rows give relu6(b1) != 0 after stage 1 and must be overwritten; interior
    # bands already got the real neighbour rows from the slice above.
    @pl.when(r == 0)
    def _():
        h1p[0:1, :, :] = jnp.zeros((1, _PAD + W + 1, c), f32)

    @pl.when(r == nbands - 1)
    def _():
        h1p[TH + 1:TH + 2, :, :] = jnp.zeros((1, _PAD + W + 1, c), f32)

    # Zero the two halo COLUMNS (left/right zero padding of the 3x3 conv).
    h1p[:, _PAD - 1:_PAD, :] = jnp.zeros((TH + 2, 1, c), f32)
    h1p[:, _PAD + W:_PAD + W + 1, :] = jnp.zeros((TH + 2, 1, c), f32)

    # ---- stage 2: depthwise 3x3 + folded BN + relu6 (full resolution) ------
    # TODO(synk): derive the dj=0/1/2 taps in-register (pltpu.roll / value
    # slices) from one band load per di to cut VMEM load-slot pressure ~3x.
    wk = w2_ref[...].astype(f32)                                  # (9, c)
    acc = jnp.zeros((TH, W, c), f32)
    for di in range(3):
        for dj in range(3):
            tap = h1p[di:di + TH, _PAD - 1 + dj:_PAD - 1 + dj + W, :]
            acc = acc + tap * wk[di * 3 + dj]
    y2 = jnp.clip(acc + b2_ref[...], 0.0, 6.0)                    # (TH, W, c)

    if stride == 2:
        # Subsample AFTER the (VALU-slack) full-res depthwise: even rows via a
        # layout-trivial leading-dim reshape, even columns via a single strided
        # read through the (no longer needed) scratch — 1 strided access vs 9.
        y2 = y2.reshape(THo, 2, W, c)[:, 0]                       # (THo, W, c)
        h1p[0:THo, 0:W, :] = y2
        y2 = h1p[0:THo, pl.ds(0, Wo, 2), :]                       # (THo, Wo, c)

    # ---- stage 3: 1x1 projection + folded BN (+ identity shortcut) ---------
    p = jnp.dot(y2.reshape(THo * Wo, c), w3_ref[...].astype(f32),
                preferred_element_type=f32)
    p = p + b3_ref[...]
    if shortcut:
        # Re-read the (already VMEM-resident) input rows only here, so no
        # (TH*W, Cin) value stays live across the long depthwise stage.
        xs = x_ref[0, pl.ds(start + W, TH * W), :].astype(f32)
        p = p + xs                                                # Cin == Cout
    # TODO(synk): for small Cout the store is lane-masked; a lane-dense
    # (THo, Wo*Cout) layout needs an in-kernel minor-dim relayout.
    o_ref[0] = p.astype(o_ref.dtype)


# ---------------------------------------------------------------------------
# Wrapper: BaseBlock.forward equivalent (NCHW in / NCHW out, like PyTorch)
# ---------------------------------------------------------------------------

def _choose_row_tile(h, w, stride, max_rows=16):
    """Largest divisor of H (<= max_rows) giving an 8-aligned output band."""
    wo = w // stride
    best = h
    for th in range(1, max_rows + 1):
        if h % th:
            continue
        if stride == 2 and th % 2:
            continue
        if h // th > 1 and ((th // stride) * wo) % 8 != 0:
            continue
        best = th
    return best


def base_block_forward(x_nchw, params, *, downsample=False, row_tile=None):
    stride = 2 if downsample else 1
    n, cin, h, w = x_nchw.shape
    if downsample and (h % 2 or w % 2):
        raise NotImplementedError("downsample path assumes even H and W")
    ho, wo = h // stride, w // stride

    c = params["w1"].shape[1]
    cout = params["w3"].shape[1]
    shortcut = (not downsample) and (cin == cout)

    # Fold BN scales into the conv weights (one-time, outside the kernel).
    w1 = params["w1"] * params["s1"][None, :]
    w2 = params["w2"] * params["s2"][None, :]
    w3 = params["w3"] * params["s3"][None, :]
    b1 = params["b1"].reshape(1, c)
    b2 = params["b2"].reshape(1, c)
    b3 = params["b3"].reshape(1, cout)

    th = row_tile if row_tile is not None else _choose_row_tile(h, w, stride)
    assert h % th == 0, "row tile must divide H"
    if stride == 2:
        assert th % 2 == 0, "row tile must be even on the stride-2 path"
    nbands = h // th
    tho = th // stride
    if nbands > 1:
        assert (tho * wo) % 8 == 0, "output band must be sublane aligned"

    # NCHW -> NHWC, one zero halo row top and bottom, rows flattened.
    x_nhwc = jnp.transpose(x_nchw, (0, 2, 3, 1))
    x_p = jnp.pad(x_nhwc, ((0, 0), (1, 1), (0, 0), (0, 0)))
    x_p = x_p.reshape(n, (h + 2) * w, cin)

    ws = _PAD + w + 1            # scratch width: aligned interior + column halos
    kernel = functools.partial(_fused_block_kernel, W=w, TH=th,
                               stride=stride, shortcut=shortcut)

    # Advisory cost estimate (helps XLA schedule the surrounding transposes).
    flops = int(n * (2 * h * w * cin * c + 2 * 9 * h * w * c
                     + 2 * ho * wo * c * cout))
    bytes_accessed = int(4 * (x_p.size + n * ho * wo * cout + w1.size + w2.size
                              + w3.size + b1.size + b2.size + b3.size))

    # Per-step VMEM working set (double-buffered IO + weights + scratch); the
    # row tile keeps this far under v7x's 64 MiB VMEM per core.
    # TODO(synk): bf16 scratch on v6e/v7x would halve this; v5e prefers f32.
    need = 4 * (2 * (h + 2) * w * cin + 2 * tho * wo * cout
                + cin * c + 9 * c + c * cout + 2 * c + cout
                + (th + 2) * ws * c)
    vmem_limit = int(min(max(2 * need, 16 * 2 ** 20), 48 * 2 ** 20))

    out = pl.pallas_call(
        kernel,
        out_shape=jax.ShapeDtypeStruct((n, ho * wo, cout), x_nchw.dtype),
        grid=(n, nbands),
        in_specs=[
            pl.BlockSpec((1, (h + 2) * w, cin), lambda b, r: (b, 0, 0)),
            pl.BlockSpec((cin, c), lambda b, r: (0, 0)),
            pl.BlockSpec((1, c), lambda b, r: (0, 0)),
            pl.BlockSpec((9, c), lambda b, r: (0, 0)),
            pl.BlockSpec((1, c), lambda b, r: (0, 0)),
            pl.BlockSpec((c, cout), lambda b, r: (0, 0)),
            pl.BlockSpec((1, cout), lambda b, r: (0, 0)),
        ],
        out_specs=pl.BlockSpec((1, tho * wo, cout), lambda b, r: (b, r, 0)),
        scratch_shapes=[pltpu.VMEM((th + 2, ws, c), jnp.float32)],
        compiler_params=pltpu.CompilerParams(
            dimension_semantics=("parallel", "parallel"),
            vmem_limit_bytes=vmem_limit,
        ),
        cost_estimate=pl.CostEstimate(flops=flops, transcendentals=0,
                                      bytes_accessed=bytes_accessed),
    )(x_p, w1, b1, w2, b2, w3, b3)

    out = out.reshape(n, ho, wo, cout)
    return jnp.transpose(out, (0, 3, 1, 2))                      # NHWC -> NCHW


# ---------------------------------------------------------------------------
# Deterministic parameter construction (same shapes as the PyTorch module)
# ---------------------------------------------------------------------------

def init_params(key, input_channel, output_channel, t=6, dtype=jnp.float32):
    c = t * input_channel
    ks = jax.random.split(key, 15)
    eps = 1e-5

    def folded_bn(kg, kb, km, kv, n_ch):
        gamma = 1.0 + 0.1 * jax.random.normal(kg, (n_ch,), dtype)
        beta = 0.1 * jax.random.normal(kb, (n_ch,), dtype)
        mean = 0.1 * jax.random.normal(km, (n_ch,), dtype)
        var = jax.random.uniform(kv, (n_ch,), dtype, 0.5, 1.5)
        scale = gamma / jnp.sqrt(var + eps)
        bias = beta - mean * scale
        return scale, bias

    params = {}
    params["w1"] = 0.3 * jax.random.normal(ks[0], (input_channel, c), dtype)
    params["w2"] = 0.3 * jax.random.normal(ks[1], (9, c), dtype)   # [di*3+dj, ch]
    params["w3"] = 0.3 * jax.random.normal(ks[2], (c, output_channel), dtype)
    params["s1"], params["b1"] = folded_bn(ks[3], ks[4], ks[5], ks[6], c)
    params["s2"], params["b2"] = folded_bn(ks[7], ks[8], ks[9], ks[10], c)
    params["s3"], params["b3"] = folded_bn(ks[11], ks[12], ks[13], ks[14],
                                           output_channel)
    return params


# ---------------------------------------------------------------------------
# Pure-JAX reference (for correctness check)
# ---------------------------------------------------------------------------

def ref_base_block(x_nchw, params, *, downsample=False):
    stride = 2 if downsample else 1
    cin = x_nchw.shape[1]
    x = jnp.transpose(x_nchw, (0, 2, 3, 1))
    h = jnp.einsum("nhwc,cd->nhwd", x, params["w1"])
    h = jnp.clip(h * params["s1"] + params["b1"], 0.0, 6.0)
    c = h.shape[-1]
    w2 = params["w2"].reshape(3, 3, c)[:, :, None, :]              # HWIO, I=1
    h = lax.conv_general_dilated(
        h, w2, (stride, stride), ((1, 1), (1, 1)),
        dimension_numbers=("NHWC", "HWIO", "NHWC"),
        feature_group_count=c)
    h = jnp.clip(h * params["s2"] + params["b2"], 0.0, 6.0)
    h = jnp.einsum("nhwc,cd->nhwd", h, params["w3"])
    h = h * params["s3"] + params["b3"]
    cout = params["w3"].shape[1]
    if (not downsample) and cin == cout:
        h = h + x
    return jnp.transpose(h, (0, 3, 1, 2))


# ---------------------------------------------------------------------------
# Main
# ---------------------------------------------------------------------------

if __name__ == "__main__":
    key = jax.random.PRNGKey(0)
    kx, kp1, kp2 = jax.random.split(key, 3)

    x = jax.random.normal(kx, (2, 4, 16, 16), jnp.float32)         # NCHW

    # Case 1: shortcut path (stride 1, Cin == Cout), 2 row bands per image.
    params1 = init_params(kp1, input_channel=4, output_channel=4, t=6)
    out1 = jax.block_until_ready(
        base_block_forward(x, params1, downsample=False, row_tile=8))
    ref1 = jax.block_until_ready(ref_base_block(x, params1, downsample=False))

    # Case 2: downsample path (stride 2, no shortcut), 2 row bands per image.
    params2 = init_params(kp2, input_channel=4, output_channel=8, t=6)
    out2 = jax.block_until_ready(
        base_block_forward(x, params2, downsample=True, row_tile=8))
    ref2 = jax.block_until_ready(ref_base_block(x, params2, downsample=True))

    assert out1.shape == (2, 4, 16, 16), out1.shape
    assert out2.shape == (2, 8, 8, 8), out2.shape
    if not np.allclose(np.asarray(out1), np.asarray(ref1), rtol=5e-3, atol=5e-3):
        raise AssertionError("shortcut-path mismatch vs reference")
    if not np.allclose(np.asarray(out2), np.asarray(ref2), rtol=5e-3, atol=5e-3):
        raise AssertionError("downsample-path mismatch vs reference")

    print("KERNEL_OK")
</pallas_src>

<mosaic_0001>
module attributes {stable_mosaic.version = 11 : i64} {
  func.func @_fused_block_kernel(%arg0: i32, %arg1: i32, %arg2: memref<1x288x4xf32, #tpu.memory_space<vmem>>, %arg3: memref<4x24xf32, #tpu.memory_space<vmem>>, %arg4: memref<1x24xf32, #tpu.memory_space<vmem>>, %arg5: memref<9x24xf32, #tpu.memory_space<vmem>>, %arg6: memref<1x24xf32, #tpu.memory_space<vmem>>, %arg7: memref<24x4xf32, #tpu.memory_space<vmem>>, %arg8: memref<1x4xf32, #tpu.memory_space<vmem>>, %arg9: memref<1x128x4xf32, #tpu.memory_space<vmem>>, %arg10: memref<10x25x24xf32, #tpu.memory_space<vmem>>) attributes {dimension_semantics = [#tpu.dimension_semantics<parallel>, #tpu.dimension_semantics<parallel>], iteration_bounds = array<i64: 2, 2>, scalar_prefetch = 0 : i64, scratch_operands = 1 : i64, tpu.core_type = #tpu.core_type<tc>, window_params = [{transform_indices = @transform_0, window_bounds = array<i64: 1, 288, 4>}, {pipeline_mode = #tpu.pipeline_mode<synchronous>, transform_indices = @transform_1, window_bounds = array<i64: 4, 24>}, {pipeline_mode = #tpu.pipeline_mode<synchronous>, transform_indices = @transform_2, window_bounds = array<i64: 1, 24>}, {pipeline_mode = #tpu.pipeline_mode<synchronous>, transform_indices = @transform_3, window_bounds = array<i64: 9, 24>}, {pipeline_mode = #tpu.pipeline_mode<synchronous>, transform_indices = @transform_4, window_bounds = array<i64: 1, 24>}, {pipeline_mode = #tpu.pipeline_mode<synchronous>, transform_indices = @transform_5, window_bounds = array<i64: 24, 4>}, {pipeline_mode = #tpu.pipeline_mode<synchronous>, transform_indices = @transform_6, window_bounds = array<i64: 1, 4>}, {transform_indices = @transform_7, window_bounds = array<i64: 1, 128, 4>}]} {
    %c128_i32 = arith.constant 128 : i32
    %0 = arith.muli %arg1, %c128_i32 : i32
    %1 = tpu.assume_multiple %0, 128 : i32
    %c0 = arith.constant 0 : index
    %2 = arith.index_cast %1 : i32 to index
    %c0_0 = arith.constant 0 : index
    %3 = vector.load %arg2[%c0, %2, %c0_0] : memref<1x288x4xf32, #tpu.memory_space<vmem>>, vector<1x160x4xf32>
    %4 = vector.shape_cast %3 : vector<1x160x4xf32> to vector<160x4xf32>
    %c0_1 = arith.constant 0 : index
    %c0_2 = arith.constant 0 : index
    %5 = vector.load %arg3[%c0_1, %c0_2] : memref<4x24xf32, #tpu.memory_space<vmem>>, vector<4x24xf32>
    %cst = arith.constant dense<0.000000e+00> : vector<160x24xf32>
    %6 = tpu.matmul %4, %5, %cst {dimension_numbers = #tpu.dot_dimension_numbers<[1], [0], [0], [1], [0, 0, 1, 1], [], []>} : vector<160x4xf32>, vector<4x24xf32>, vector<160x24xf32> -> vector<160x24xf32>
    %c0_3 = arith.constant 0 : index
    %c0_4 = arith.constant 0 : index
    %7 = vector.load %arg4[%c0_3, %c0_4] : memref<1x24xf32, #tpu.memory_space<vmem>>, vector<1x24xf32>
    %8 = vector.broadcast %7 : vector<1x24xf32> to vector<160x24xf32>
    %9 = arith.addf %6, %8 : vector<160x24xf32>
    %cst_5 = arith.constant 0.000000e+00 : f32
    %cst_6 = arith.constant 6.000000e+00 : f32
    %10 = vector.broadcast %cst_5 : f32 to vector<160x24xf32>
    %11 = arith.maximumf %10, %9 : vector<160x24xf32>
    %12 = vector.broadcast %cst_6 : f32 to vector<160x24xf32>
    %13 = arith.minimumf %12, %11 : vector<160x24xf32>
    %14 = vector.shape_cast %13 : vector<160x24xf32> to vector<10x16x24xf32>
    %c0_7 = arith.constant 0 : index
    %c8 = arith.constant 8 : index
    %c0_8 = arith.constant 0 : index
    %15 = vector.load %arg10[%c0_7, %c8, %c0_8] : memref<10x25x24xf32, #tpu.memory_space<vmem>>, vector<10x16x24xf32>
    tpu.vector_store %arg10[%c0_7, %c8, %c0_8], %14 {strides = array<i32>} : memref<10x25x24xf32, #tpu.memory_space<vmem>>, vector<10x16x24xf32>,
    %c0_i32 = arith.constant 0 : i32
    %16 = arith.cmpi eq, %arg1, %c0_i32 : i32
    %17 = arith.extui %16 : i1 to i32
    %c0_i32_9 = arith.constant 0 : i32
    %18 = arith.cmpi ne, %17, %c0_i32_9 : i32
    scf.if %18 {
      %cst_58 = arith.constant 0.000000e+00 : f32
      %113 = vector.broadcast %cst_58 : f32 to vector<1x25x24xf32>
      %c0_59 = arith.constant 0 : index
      %c0_60 = arith.constant 0 : index
      %c0_61 = arith.constant 0 : index
      %114 = vector.load %arg10[%c0_59, %c0_60, %c0_61] : memref<10x25x24xf32, #tpu.memory_space<vmem>>, vector<1x25x24xf32>
      tpu.vector_store %arg10[%c0_59, %c0_60, %c0_61], %113 {strides = array<i32>} : memref<10x25x24xf32, #tpu.memory_space<vmem>>, vector<1x25x24xf32>,
    } else {
    }
    %c1_i32 = arith.constant 1 : i32
    %19 = arith.cmpi eq, %arg1, %c1_i32 : i32
    %20 = arith.extui %19 : i1 to i32
    %c0_i32_10 = arith.constant 0 : i32
    %21 = arith.cmpi ne, %20, %c0_i32_10 : i32
    scf.if %21 {
      %cst_58 = arith.constant 0.000000e+00 : f32
      %113 = vector.broadcast %cst_58 : f32 to vector<1x25x24xf32>
      %c9_59 = arith.constant 9 : index
      %c0_60 = arith.constant 0 : index
      %c0_61 = arith.constant 0 : index
      %114 = vector.load %arg10[%c9_59, %c0_60, %c0_61] : memref<10x25x24xf32, #tpu.memory_space<vmem>>, vector<1x25x24xf32>
      tpu.vector_store %arg10[%c9_59, %c0_60, %c0_61], %113 {strides = array<i32>} : memref<10x25x24xf32, #tpu.memory_space<vmem>>, vector<1x25x24xf32>,
    } else {
    }
    %cst_11 = arith.constant 0.000000e+00 : f32
    %22 = vector.broadcast %cst_11 : f32 to vector<10x1x24xf32>
    %c0_12 = arith.constant 0 : index
    %c7 = arith.constant 7 : index
    %c0_13 = arith.constant 0 : index
    %23 = vector.load %arg10[%c0_12, %c7, %c0_13] : memref<10x25x24xf32, #tpu.memory_space<vmem>>, vector<10x1x24xf32>
    tpu.vector_store %arg10[%c0_12, %c7, %c0_13], %22 {strides = array<i32>} : memref<10x25x24xf32, #tpu.memory_space<vmem>>, vector<10x1x24xf32>,
    %cst_14 = arith.constant 0.000000e+00 : f32
    %24 = vector.broadcast %cst_14 : f32 to vector<10x1x24xf32>
    %c0_15 = arith.constant 0 : index
    %c24 = arith.constant 24 : index
    %c0_16 = arith.constant 0 : index
    %25 = vector.load %arg10[%c0_15, %c24, %c0_16] : memref<10x25x24xf32, #tpu.memory_space<vmem>>, vector<10x1x24xf32>
    tpu.vector_store %arg10[%c0_15, %c24, %c0_16], %24 {strides = array<i32>} : memref<10x25x24xf32, #tpu.memory_space<vmem>>, vector<10x1x24xf32>,
    %c0_17 = arith.constant 0 : index
    %c0_18 = arith.constant 0 : index
    %26 = vector.load %arg5[%c0_17, %c0_18] : memref<9x24xf32, #tpu.memory_space<vmem>>, vector<9x24xf32>
    %cst_19 = arith.constant 0.000000e+00 : f32
    %27 = vector.broadcast %cst_19 : f32 to vector<8x16x24xf32>
    %c0_20 = arith.constant 0 : index
    %c7_21 = arith.constant 7 : index
    %c0_22 = arith.constant 0 : index
    %28 = vector.load %arg10[%c0_20, %c7_21, %c0_22] : memref<10x25x24xf32, #tpu.memory_space<vmem>>, vector<8x16x24xf32>
    %29 = vector.extract_strided_slice %26 {offsets = [0, 0], sizes = [1, 24], strides = [1, 1]} : vector<9x24xf32> to vector<1x24xf32>
    %30 = vector.shape_cast %29 : vector<1x24xf32> to vector<24xf32>
    %31 = vector.shape_cast %30 : vector<24xf32> to vector<1x1x24xf32>
    %32 = vector.broadcast %31 : vector<1x1x24xf32> to vector<8x16x24xf32>
    %33 = arith.mulf %28, %32 : vector<8x16x24xf32>
    %34 = arith.addf %27, %33 : vector<8x16x24xf32>
    %c0_23 = arith.constant 0 : index
    %c8_24 = arith.constant 8 : index
    %c0_25 = arith.constant 0 : index
    %35 = vector.load %arg10[%c0_23, %c8_24, %c0_25] : memref<10x25x24xf32, #tpu.memory_space<vmem>>, vector<8x16x24xf32>
    %36 = vector.extract_strided_slice %26 {offsets = [1, 0], sizes = [1, 24], strides = [1, 1]} : vector<9x24xf32> to vector<1x24xf32>
    %37 = vector.shape_cast %36 : vector<1x24xf32> to vector<24xf32>
    %38 = vector.shape_cast %37 : vector<24xf32> to vector<1x1x24xf32>
    %39 = vector.broadcast %38 : vector<1x1x24xf32> to vector<8x16x24xf32>
    %40 = arith.mulf %35, %39 : vector<8x16x24xf32>
    %41 = arith.addf %34, %40 : vector<8x16x24xf32>
    %c0_26 = arith.constant 0 : index
    %c9 = arith.constant 9 : index
    %c0_27 = arith.constant 0 : index
    %42 = vector.load %arg10[%c0_26, %c9, %c0_27] : memref<10x25x24xf32, #tpu.memory_space<vmem>>, vector<8x16x24xf32>
    %43 = vector.extract_strided_slice %26 {offsets = [2, 0], sizes = [1, 24], strides = [1, 1]} : vector<9x24xf32> to vector<1x24xf32>
    %44 = vector.shape_cast %43 : vector<1x24xf32> to vector<24xf32>
    %45 = vector.shape_cast %44 : vector<24xf32> to vector<1x1x24xf32>
    %46 = vector.broadcast %45 : vector<1x1x24xf32> to vector<8x16x24xf32>
    %47 = arith.mulf %42, %46 : vector<8x16x24xf32>
    %48 = arith.addf %41, %47 : vector<8x16x24xf32>
    %c1 = arith.constant 1 : index
    %c7_28 = arith.constant 7 : index
    %c0_29 = arith.constant 0 : index
    %49 = vector.load %arg10[%c1, %c7_28, %c0_29] : memref<10x25x24xf32, #tpu.memory_space<vmem>>, vector<8x16x24xf32>
    %50 = vector.extract_strided_slice %26 {offsets = [3, 0], sizes = [1, 24], strides = [1, 1]} : vector<9x24xf32> to vector<1x24xf32>
    %51 = vector.shape_cast %50 : vector<1x24xf32> to vector<24xf32>
    %52 = vector.shape_cast %51 : vector<24xf32> to vector<1x1x24xf32>
    %53 = vector.broadcast %52 : vector<1x1x24xf32> to vector<8x16x24xf32>
    %54 = arith.mulf %49, %53 : vector<8x16x24xf32>
    %55 = arith.addf %48, %54 : vector<8x16x24xf32>
    %c1_30 = arith.constant 1 : index
    %c8_31 = arith.constant 8 : index
    %c0_32 = arith.constant 0 : index
    %56 = vector.load %arg10[%c1_30, %c8_31, %c0_32] : memref<10x25x24xf32, #tpu.memory_space<vmem>>, vector<8x16x24xf32>
    %57 = vector.extract_strided_slice %26 {offsets = [4, 0], sizes = [1, 24], strides = [1, 1]} : vector<9x24xf32> to vector<1x24xf32>
    %58 = vector.shape_cast %57 : vector<1x24xf32> to vector<24xf32>
    %59 = vector.shape_cast %58 : vector<24xf32> to vector<1x1x24xf32>
    %60 = vector.broadcast %59 : vector<1x1x24xf32> to vector<8x16x24xf32>
    %61 = arith.mulf %56, %60 : vector<8x16x24xf32>
    %62 = arith.addf %55, %61 : vector<8x16x24xf32>
    %c1_33 = arith.constant 1 : index
    %c9_34 = arith.constant 9 : index
    %c0_35 = arith.constant 0 : index
    %63 = vector.load %arg10[%c1_33, %c9_34, %c0_35] : memref<10x25x24xf32, #tpu.memory_space<vmem>>, vector<8x16x24xf32>
    %64 = vector.extract_strided_slice %26 {offsets = [5, 0], sizes = [1, 24], strides = [1, 1]} : vector<9x24xf32> to vector<1x24xf32>
    %65 = vector.shape_cast %64 : vector<1x24xf32> to vector<24xf32>
    %66 = vector.shape_cast %65 : vector<24xf32> to vector<1x1x24xf32>
    %67 = vector.broadcast %66 : vector<1x1x24xf32> to vector<8x16x24xf32>
    %68 = arith.mulf %63, %67 : vector<8x16x24xf32>
    %69 = arith.addf %62, %68 : vector<8x16x24xf32>
    %c2 = arith.constant 2 : index
    %c7_36 = arith.constant 7 : index
    %c0_37 = arith.constant 0 : index
    %70 = vector.load %arg10[%c2, %c7_36, %c0_37] : memref<10x25x24xf32, #tpu.memory_space<vmem>>, vector<8x16x24xf32>
    %71 = vector.extract_strided_slice %26 {offsets = [6, 0], sizes = [1, 24], strides = [1, 1]} : vector<9x24xf32> to vector<1x24xf32>
    %72 = vector.shape_cast %71 : vector<1x24xf32> to vector<24xf32>
    %73 = vector.shape_cast %72 : vector<24xf32> to vector<1x1x24xf32>
    %74 = vector.broadcast %73 : vector<1x1x24xf32> to vector<8x16x24xf32>
    %75 = arith.mulf %70, %74 : vector<8x16x24xf32>
    %76 = arith.addf %69, %75 : vector<8x16x24xf32>
    %c2_38 = arith.constant 2 : index
    %c8_39 = arith.constant 8 : index
    %c0_40 = arith.constant 0 : index
    %77 = vector.load %arg10[%c2_38, %c8_39, %c0_40] : memref<10x25x24xf32, #tpu.memory_space<vmem>>, vector<8x16x24xf32>
    %78 = vector.extract_strided_slice %26 {offsets = [7, 0], sizes = [1, 24], strides = [1, 1]} : vector<9x24xf32> to vector<1x24xf32>
    %79 = vector.shape_cast %78 : vector<1x24xf32> to vector<24xf32>
    %80 = vector.shape_cast %79 : vector<24xf32> to vector<1x1x24xf32>
    %81 = vector.broadcast %80 : vector<1x1x24xf32> to vector<8x16x24xf32>
    %82 = arith.mulf %77, %81 : vector<8x16x24xf32>
    %83 = arith.addf %76, %82 : vector<8x16x24xf32>
    %c2_41 = arith.constant 2 : index
    %c9_42 = arith.constant 9 : index
    %c0_43 = arith.constant 0 : index
    %84 = vector.load %arg10[%c2_41, %c9_42, %c0_43] : memref<10x25x24xf32, #tpu.memory_space<vmem>>, vector<8x16x24xf32>
    %85 = vector.extract_strided_slice %26 {offsets = [8, 0], sizes = [1, 24], strides = [1, 1]} : vector<9x24xf32> to vector<1x24xf32>
    %86 = vector.shape_cast %85 : vector<1x24xf32> to vector<24xf32>
    %87 = vector.shape_cast %86 : vector<24xf32> to vector<1x1x24xf32>
    %88 = vector.broadcast %87 : vector<1x1x24xf32> to vector<8x16x24xf32>
    %89 = arith.mulf %84, %88 : vector<8x16x24xf32>
    %90 = arith.addf %83, %89 : vector<8x16x24xf32>
    %c0_44 = arith.constant 0 : index
    %c0_45 = arith.constant 0 : index
    %91 = vector.load %arg6[%c0_44, %c0_45] : memref<1x24xf32, #tpu.memory_space<vmem>>, vector<1x24xf32>
    %92 = vector.shape_cast %91 : vector<1x24xf32> to vector<1x1x24xf32>
    %93 = vector.broadcast %92 : vector<1x1x24xf32> to vector<8x16x24xf32>
    %94 = arith.addf %90, %93 : vector<8x16x24xf32>
    %cst_46 = arith.constant 0.000000e+00 : f32
    %cst_47 = arith.constant 6.000000e+00 : f32
    %95 = vector.broadcast %cst_46 : f32 to vector<8x16x24xf32>
    %96 = arith.maximumf %95, %94 : vector<8x16x24xf32>
    %97 = vector.broadcast %cst_47 : f32 to vector<8x16x24xf32>
    %98 = arith.minimumf %97, %96 : vector<8x16x24xf32>
    %99 = vector.shape_cast %98 : vector<8x16x24xf32> to vector<128x24xf32>
    %c0_48 = arith.constant 0 : index
    %c0_49 = arith.constant 0 : index
    %100 = vector.load %arg7[%c0_48, %c0_49] : memref<24x4xf32, #tpu.memory_space<vmem>>, vector<24x4xf32>
    %cst_50 = arith.constant dense<0.000000e+00> : vector<128x4xf32>
    %101 = tpu.matmul %99, %100, %cst_50 {dimension_numbers = #tpu.dot_dimension_numbers<[1], [0], [0], [1], [0, 0, 1, 1], [], []>} : vector<128x24xf32>, vector<24x4xf32>, vector<128x4xf32> -> vector<128x4xf32>
    %c0_51 = arith.constant 0 : index
    %c0_52 = arith.constant 0 : index
    %102 = vector.load %arg8[%c0_51, %c0_52] : memref<1x4xf32, #tpu.memory_space<vmem>>, vector<1x4xf32>
    %103 = vector.broadcast %102 : vector<1x4xf32> to vector<128x4xf32>
    %104 = arith.addf %101, %103 : vector<128x4xf32>
    %c16_i32 = arith.constant 16 : i32
    %105 = arith.addi %1, %c16_i32 : i32
    %c0_53 = arith.constant 0 : index
    %106 = arith.index_cast %105 : i32 to index
    %c0_54 = arith.constant 0 : index
    %107 = vector.load %arg2[%c0_53, %106, %c0_54] : memref<1x288x4xf32, #tpu.memory_space<vmem>>, vector<1x128x4xf32>
    %108 = vector.shape_cast %107 : vector<1x128x4xf32> to vector<128x4xf32>
    %109 = arith.addf %104, %108 : vector<128x4xf32>
    %c0_55 = arith.constant 0 : index
    %c0_56 = arith.constant 0 : index
    %c0_57 = arith.constant 0 : index
    %110 = vector.load %arg9[%c0_55, %c0_56, %c0_57] : memref<1x128x4xf32, #tpu.memory_space<vmem>>, vector<1x128x4xf32>
    %111 = vector.shape_cast %110 : vector<1x128x4xf32> to vector<128x4xf32>
    %112 = vector.shape_cast %109 : vector<128x4xf32> to vector<1x128x4xf32>
    tpu.vector_store %arg9[%c0_55, %c0_56, %c0_57], %112 {strides = array<i32>} : memref<1x128x4xf32, #tpu.memory_space<vmem>>, vector<1x128x4xf32>,
    return
  }
  func.func @transform_0(%arg0: i32, %arg1: i32) -> (i32, i32, i32) {
    %c0_i32 = arith.constant 0 : i32
    %c0_i32_0 = arith.constant 0 : i32
    %c0_i32_1 = arith.constant 0 : i32
    return %arg0, %c0_i32, %c0_i32_0 : i32, i32, i32
  }
  func.func @transform_1(%arg0: i32, %arg1: i32) -> (i32, i32) {
    %c0_i32 = arith.constant 0 : i32
    %c0_i32_0 = arith.constant 0 : i32
    %c0_i32_1 = arith.constant 0 : i32
    return %c0_i32, %c0_i32_0 : i32, i32
  }
  func.func @transform_2(%arg0: i32, %arg1: i32) -> (i32, i32) {
    %c0_i32 = arith.constant 0 : i32
    %c0_i32_0 = arith.constant 0 : i32
    %c0_i32_1 = arith.constant 0 : i32
    return %c0_i32, %c0_i32_0 : i32, i32
  }
  func.func @transform_3(%arg0: i32, %arg1: i32) -> (i32, i32) {
    %c0_i32 = arith.constant 0 : i32
    %c0_i32_0 = arith.constant 0 : i32
    %c0_i32_1 = arith.constant 0 : i32
    return %c0_i32, %c0_i32_0 : i32, i32
  }
  func.func @transform_4(%arg0: i32, %arg1: i32) -> (i32, i32) {
    %c0_i32 = arith.constant 0 : i32
    %c0_i32_0 = arith.constant 0 : i32
    %c0_i32_1 = arith.constant 0 : i32
    return %c0_i32, %c0_i32_0 : i32, i32
  }
  func.func @transform_5(%arg0: i32, %arg1: i32) -> (i32, i32) {
    %c0_i32 = arith.constant 0 : i32
    %c0_i32_0 = arith.constant 0 : i32
    %c0_i32_1 = arith.constant 0 : i32
    return %c0_i32, %c0_i32_0 : i32, i32
  }
  func.func @transform_6(%arg0: i32, %arg1: i32) -> (i32, i32) {
    %c0_i32 = arith.constant 0 : i32
    %c0_i32_0 = arith.constant 0 : i32
    %c0_i32_1 = arith.constant 0 : i32
    return %c0_i32, %c0_i32_0 : i32, i32
  }
  func.func @transform_7(%arg0: i32, %arg1: i32) -> (i32, i32, i32) {
    %c0_i32 = arith.constant 0 : i32
    %c0_i32_0 = arith.constant 0 : i32
    return %arg0, %arg1, %c0_i32 : i32, i32, i32
  }
}

</mosaic_0001>

<llo_original>
// kernel: tpu_custom_call.1
$region0: #{tpu_custom_call.1}
  #allocation0 [shape = 'u32[]', space=smem, size = 0x4, offset = 0x4, fixed_abs, tag = 'smem constant byte address 0x4 - core index']
  #allocation1 [shape = 'u32[144,128]{1,0:T(1,128)}', space=vmem, size = 0x12000, scoped, tag = 'internal scratch']
  #allocation2 [shape = 'f32[10,25,24]{2,1,0:T(8,128)}', space=vmem, size = 0x28000, scoped, tag = 'scratch operand']
  %s0 = inlined_call_operand.vmem [shape: f32[2,288,4], index: 0, kind: input, shape index: {}]
  %s1 = inlined_call_operand.vmem [shape: f32[4,24], index: 1, kind: input, shape index: {}]
  %s2 = inlined_call_operand.vmem [shape: f32[1,24], index: 2, kind: input, shape index: {}]
  %s3 = inlined_call_operand.vmem [shape: f32[9,24], index: 3, kind: input, shape index: {}]
  %s4 = inlined_call_operand.vmem [shape: f32[1,24], index: 4, kind: input, shape index: {}]
  %s5 = inlined_call_operand.vmem [shape: f32[24,4], index: 5, kind: input, shape index: {}]
  %s6 = inlined_call_operand.vmem [shape: f32[1,4], index: 6, kind: input, shape index: {}]
  %s7 = inlined_call_operand.vmem [shape: f32[2,256,4], index: 7, kind: output, shape index: {}]
  %s8 = sld [smem:[#allocation0]]
  $region69: #{tpu_custom_call.1} parent=0
    _
  %s10 = ssub.s32 1, %s8
  %s11 = scalar_select 0, %s10, %s8
  loop: start=0, step=1, limit=6
  $region2: #{tpu_custom_call.1} parent=0 // loop_pre_header
    _
  $region3: #{tpu_custom_call.1} parent=0 // loop_header
    %s13 = sphi 0, %s17
    %p14 = scmp.ge.s32.totalorder %s13, 6
    %s20 = sphi 0, %s32
    %s21 = sphi 0, %s28
    %s22 = sphi 0, %s20
    %s23 = sphi 0, %s21
    %s24 = sphi 0, %s22
    %s25 = sphi 0, %s23
    %s35 = sphi 0, %s37
    %s38 = sphi 0, %s35
    %s39 = sphi 0, %s38
    %s55 = sphi 0, %s39
    %s59 = sphi 0, %s59
    %s61 = sphi 0, %s59
    %s62 = sphi 0, %s61
    %s76 = sphi 0, %s62
    %s80 = sphi 0, %s80
    %s82 = sphi 0, %s80
    %s83 = sphi 0, %s82
    %s97 = sphi 0, %s83
    %s101 = sphi 0, %s101
    %s103 = sphi 0, %s101
    %s104 = sphi 0, %s103
    %s118 = sphi 0, %s104
    %s122 = sphi 0, %s122
    %s124 = sphi 0, %s122
    %s125 = sphi 0, %s124
    %s139 = sphi 0, %s125
    %s143 = sphi 0, %s143
    %s145 = sphi 0, %s143
    %s146 = sphi 0, %s145
    %s160 = sphi 0, %s146
    %s164 = sphi 0, %s164
    %s166 = sphi 0, %s164
    %s167 = sphi 0, %s166
    %s181 = sphi 0, %s167
    %s189 = sphi 0, %s191
    %s192 = sphi 0, %s189
    %s193 = sphi 0, %s192
    %s209 = sphi 0, %s193
  $region4: #{tpu_custom_call.1} parent=0 // loop_header_branch
    %16 = sbr.rel (%p14) target = $region8
  $region5: #{tpu_custom_call.1} parent=0 // loop_body
    %s18 = ssub.s32 %s13, 1
    %s19 = ssub.s32 %s13, 2
    %s26 = sadd.s32 1, %s21
    %p27 = scmp.ge.s32.totalorder %s26, 2
    %s28 = scalar_select %p27, 0, %s26
    %s29 = sadd.s32 1, %s20
    %s30 = scalar_select %p27, %s29, %s20
    %p31 = scmp.ge.s32.totalorder %s30, 2
    %s32 = scalar_select %p31, 0, %s30
    %s33 = ssub.s32 %s20, %s32
    %p34 = scmp.eq.s32.totalorder %s33, 0
    %s36 = sadd.s32 %s35, 1
    %s37 = scalar_select %p34, %s35, %s36
    %p40 = pneg %p34
    %p41 = scmp.eq.s32.totalorder %s13, 3
    %p42 = por %p40, %p41
    %p43 = scmp.ne.s32.totalorder %s35, %s38
    %p44 = scmp.eq.s32.totalorder %s13, 0
    %p45 = por %p43, %p44
    %p46 = scmp.ne.s32.totalorder %s35, %s38
    %p47 = scmp.eq.s32.totalorder %s18, 3
    %p48 = por %p46, %p47
    %p49 = scmp.ne.s32.totalorder %s38, %s39
    %p50 = scmp.eq.s32.totalorder %s18, 0
    %p51 = por %p49, %p50
    %p52 = scmp.ne.s32.totalorder %s38, %s39
    %p53 = scmp.eq.s32.totalorder %s19, 3
    %p54 = por %p52, %p53
    %p56 = scmp.ne.s32.totalorder %s39, %s55
    %p57 = scmp.eq.s32.totalorder %s19, 0
    %p58 = por %p56, %p57
    %s60 = sadd.s32 %s59, 1
    %p63 = scmp.eq.s32.totalorder %s13, 3
    %p64 = scmp.ne.s32.totalorder %s59, %s61
    %p65 = scmp.eq.s32.totalorder %s13, 0
    %p66 = por %p64, %p65
    %p67 = scmp.ne.s32.totalorder %s59, %s61
    %p68 = scmp.eq.s32.totalorder %s18, 3
    %p69 = por %p67, %p68
    %p70 = scmp.ne.s32.totalorder %s61, %s62
    %p71 = scmp.eq.s32.totalorder %s18, 0
    %p72 = por %p70, %p71
    %p73 = scmp.ne.s32.totalorder %s61, %s62
    %p74 = scmp.eq.s32.totalorder %s19, 3
    %p75 = por %p73, %p74
    %p77 = scmp.ne.s32.totalorder %s62, %s76
    %p78 = scmp.eq.s32.totalorder %s19, 0
    %p79 = por %p77, %p78
    %s81 = sadd.s32 %s80, 1
    %p84 = scmp.eq.s32.totalorder %s13, 3
    %p85 = scmp.ne.s32.totalorder %s80, %s82
    %p86 = scmp.eq.s32.totalorder %s13, 0
    %p87 = por %p85, %p86
    %p88 = scmp.ne.s32.totalorder %s80, %s82
    %p89 = scmp.eq.s32.totalorder %s18, 3
    %p90 = por %p88, %p89
    %p91 = scmp.ne.s32.totalorder %s82, %s83
    %p92 = scmp.eq.s32.totalorder %s18, 0
    %p93 = por %p91, %p92
    %p94 = scmp.ne.s32.totalorder %s82, %s83
    %p95 = scmp.eq.s32.totalorder %s19, 3
    %p96 = por %p94, %p95
    %p98 = scmp.ne.s32.totalorder %s83, %s97
    %p99 = scmp.eq.s32.totalorder %s19, 0
    %p100 = por %p98, %p99
    %s102 = sadd.s32 %s101, 1
    %p105 = scmp.eq.s32.totalorder %s13, 3
    %p106 = scmp.ne.s32.totalorder %s101, %s103
    %p107 = scmp.eq.s32.totalorder %s13, 0
    %p108 = por %p106, %p107
    %p109 = scmp.ne.s32.totalorder %s101, %s103
    %p110 = scmp.eq.s32.totalorder %s18, 3
    %p111 = por %p109, %p110
    %p112 = scmp.ne.s32.totalorder %s103, %s104
    %p113 = scmp.eq.s32.totalorder %s18, 0
    %p114 = por %p112, %p113
    %p115 = scmp.ne.s32.totalorder %s103, %s104
    %p116 = scmp.eq.s32.totalorder %s19, 3
    %p117 = por %p115, %p116
    %p119 = scmp.ne.s32.totalorder %s104, %s118
    %p120 = scmp.eq.s32.totalorder %s19, 0
    %p121 = por %p119, %p120
    %s123 = sadd.s32 %s122, 1
    %p126 = scmp.eq.s32.totalorder %s13, 3
    %p127 = scmp.ne.s32.totalorder %s122, %s124
    %p128 = scmp.eq.s32.totalorder %s13, 0
    %p129 = por %p127, %p128
    %p130 = scmp.ne.s32.totalorder %s122, %s124
    %p131 = scmp.eq.s32.totalorder %s18, 3
    %p132 = por %p130, %p131
    %p133 = scmp.ne.s32.totalorder %s124, %s125
    %p134 = scmp.eq.s32.totalorder %s18, 0
    %p135 = por %p133, %p134
    %p136 = scmp.ne.s32.totalorder %s124, %s125
    %p137 = scmp.eq.s32.totalorder %s19, 3
    %p138 = por %p136, %p137
    %p140 = scmp.ne.s32.totalorder %s125, %s139
    %p141 = scmp.eq.s32.totalorder %s19, 0
    %p142 = por %p140, %p141
    %s144 = sadd.s32 %s143, 1
    %p147 = scmp.eq.s32.totalorder %s13, 3
    %p148 = scmp.ne.s32.totalorder %s143, %s145
    %p149 = scmp.eq.s32.totalorder %s13, 0
    %p150 = por %p148, %p149
    %p151 = scmp.ne.s32.totalorder %s143, %s145
    %p152 = scmp.eq.s32.totalorder %s18, 3
    %p153 = por %p151, %p152
    %p154 = scmp.ne.s32.totalorder %s145, %s146
    %p155 = scmp.eq.s32.totalorder %s18, 0
    %p156 = por %p154, %p155
    %p157 = scmp.ne.s32.totalorder %s145, %s146
    %p158 = scmp.eq.s32.totalorder %s19, 3
    %p159 = por %p157, %p158
    %p161 = scmp.ne.s32.totalorder %s146, %s160
    %p162 = scmp.eq.s32.totalorder %s19, 0
    %p163 = por %p161, %p162
    %s165 = sadd.s32 %s164, 1
    %p168 = scmp.eq.s32.totalorder %s13, 3
    %p169 = scmp.ne.s32.totalorder %s164, %s166
    %p170 = scmp.eq.s32.totalorder %s13, 0
    %p171 = por %p169, %p170
    %p172 = scmp.ne.s32.totalorder %s164, %s166
    %p173 = scmp.eq.s32.totalorder %s18, 3
    %p174 = por %p172, %p173
    %p175 = scmp.ne.s32.totalorder %s166, %s167
    %p176 = scmp.eq.s32.totalorder %s18, 0
    %p177 = por %p175, %p176
    %p178 = scmp.ne.s32.totalorder %s166, %s167
    %p179 = scmp.eq.s32.totalorder %s19, 3
    %p180 = por %p178, %p179
    %p182 = scmp.ne.s32.totalorder %s167, %s181
    %p183 = scmp.eq.s32.totalorder %s19, 0
    %p184 = por %p182, %p183
    %s185 = ssub.s32 %s20, %s32
    %s186 = ssub.s32 %s21, %s28
    %s187 = sor.u32 %s185, %s186
    %p188 = scmp.eq.s32.totalorder %s187, 0
    %s190 = sadd.s32 %s189, 1
    %s191 = scalar_select %p188, %s189, %s190
    %p194 = pneg %p188
    %p195 = scmp.eq.s32.totalorder %s13, 3
    %p196 = por %p194, %p195
    %p197 = scmp.ne.s32.totalorder %s189, %s192
    %p198 = scmp.eq.s32.totalorder %s13, 0
    %p199 = por %p197, %p198
    %p200 = scmp.ne.s32.totalorder %s189, %s192
    %p201 = scmp.eq.s32.totalorder %s18, 3
    %p202 = por %p200, %p201
    %p203 = scmp.ne.s32.totalorder %s192, %s193
    %p204 = scmp.eq.s32.totalorder %s18, 0
    %p205 = por %p203, %p204
    %p206 = scmp.ne.s32.totalorder %s192, %s193
    %p207 = scmp.eq.s32.totalorder %s19, 3
    %p208 = por %p206, %p207
    %p210 = scmp.ne.s32.totalorder %s193, %s209
    %p211 = scmp.eq.s32.totalorder %s19, 0
    %p212 = por %p210, %p211
    %p213 = scmp.le.s32.totalorder 1, %s13
    %p214 = scmp.lt.s32.totalorder %s13, 5
    %p215 = pnand %p213, %p214
    %p216 = pneg %p215
    // Predicated region
    $region9: #{tpu_custom_call.1} parent=5 // pred_check
      _
    $region10: #{tpu_custom_call.1} parent=5 // pred_check_branch
      %218 = sbr.rel (%p215) target = $region12
    $region11: #{tpu_custom_call.1} parent=5 // pred_region
      %s219 = ssub.s32 %s13, 1
      // Predicated region
      $region13: #{tpu_custom_call.1} parent=11 // pred_check
        %p220 = pneg %p72
      $region14: #{tpu_custom_call.1} parent=11 // pred_check_branch
        %222 = sbr.rel (%p220) target = $region16
      $region15: #{tpu_custom_call.1} parent=11 // pred_region
        _
      $region16: #{tpu_custom_call.1} parent=11 // pred_fallthru
        _
      // Predicated region
      $region17: #{tpu_custom_call.1} parent=11 // pred_check
        %p223 = pneg %p93
      $region18: #{tpu_custom_call.1} parent=11 // pred_check_branch
        %225 = sbr.rel (%p223) target = $region20
      $region19: #{tpu_custom_call.1} parent=11 // pred_region
        _
      $region20: #{tpu_custom_call.1} parent=11 // pred_fallthru
        _
      // Predicated region
      $region21: #{tpu_custom_call.1} parent=11 // pred_check
        %p226 = pneg %p114
      $region22: #{tpu_custom_call.1} parent=11 // pred_check_branch
        %228 = sbr.rel (%p226) target = $region24
      $region23: #{tpu_custom_call.1} parent=11 // pred_region
        _
      $region24: #{tpu_custom_call.1} parent=11 // pred_fallthru
        _
      // Predicated region
      $region25: #{tpu_custom_call.1} parent=11 // pred_check
        %p229 = pneg %p135
      $region26: #{tpu_custom_call.1} parent=11 // pred_check_branch
        %231 = sbr.rel (%p229) target = $region28
      $region27: #{tpu_custom_call.1} parent=11 // pred_region
        _
      $region28: #{tpu_custom_call.1} parent=11 // pred_fallthru
        _
      // Predicated region
      $region29: #{tpu_custom_call.1} parent=11 // pred_check
        %p232 = pneg %p156
      $region30: #{tpu_custom_call.1} parent=11 // pred_check_branch
        %234 = sbr.rel (%p232) target = $region32
      $region31: #{tpu_custom_call.1} parent=11 // pred_region
        _
      $region32: #{tpu_custom_call.1} parent=11 // pred_fallthru
        _
      // Predicated region
      $region33: #{tpu_custom_call.1} parent=11 // pred_check
        %p235 = pneg %p177
      $region34: #{tpu_custom_call.1} parent=11 // pred_check_branch
        %237 = sbr.rel (%p235) target = $region36
      $region35: #{tpu_custom_call.1} parent=11 // pred_region
        _
      $region36: #{tpu_custom_call.1} parent=11 // pred_fallthru
        _
    $region12: #{tpu_custom_call.1} parent=5 // pred_fallthru
      _
    %p238 = scmp.lt.s32.totalorder %s13, 4
    // Predicated region
    $region37: #{tpu_custom_call.1} parent=5 // pred_check
      %p239 = pneg %p238
    $region38: #{tpu_custom_call.1} parent=5 // pred_check_branch
      %241 = sbr.rel (%p239) target = $region40
    $region39: #{tpu_custom_call.1} parent=5 // pred_region
      // Predicated region
      $region41: #{tpu_custom_call.1} parent=39 // pred_check
        %p242 = pneg %p45
      $region42: #{tpu_custom_call.1} parent=39 // pred_check_branch
        %244 = sbr.rel (%p242) target = $region44
      $region43: #{tpu_custom_call.1} parent=39 // pred_region
        %p245 = scmp.lt.s32.totalorder %s20, 1
        %s246 = scalar_select %p245, %s20, 1
        %s247 = smul.addr %s246, 36
        %s248 = smul.addr %s247, 8
        %s249 = scalar_lea.vmem %s0, %s248
      $region44: #{tpu_custom_call.1} parent=39 // pred_fallthru
        _
    $region40: #{tpu_custom_call.1} parent=5 // pred_fallthru
      _
    %p250 = scmp.le.s32.totalorder 1, %s13
    %p251 = scmp.lt.s32.totalorder %s13, 5
    %p252 = pnand %p250, %p251
    %p253 = pneg %p252
    // Predicated region
    $region45: #{tpu_custom_call.1} parent=5 // pred_check
      _
    $region46: #{tpu_custom_call.1} parent=5 // pred_check_branch
      %255 = sbr.rel (%p252) target = $region48
    $region47: #{tpu_custom_call.1} parent=5 // pred_region
      %s256 = ssub.s32 %s13, 1
      %p257 = scmp.lt.s32.totalorder %s22, 1
      %s258 = scalar_select %p257, %s22, 1
      %s259 = smul.addr %s258, 36
      %s260 = smul.addr %s259, 8
      %s261 = scalar_lea.vmem %s0, %s260
      %p262 = pneg %p51
      %p263 = pneg %p48
      %p264 = pneg %p72
      %p265 = pneg %p69
      %p266 = pneg %p93
      %p267 = pneg %p90
      %p268 = pneg %p114
      %p269 = pneg %p111
      %p270 = pneg %p135
      %p271 = pneg %p132
      %p272 = pneg %p156
      %p273 = pneg %p153
      %p274 = pneg %p177
      %p275 = pneg %p174
      %p276 = pneg %p205
      %p277 = pneg %p202
      %s278 = smul.u32 16, %s23
      %p279 = scmp.lt.s32.totalorder %s22, 1
      %s280 = scalar_select %p279, %s22, 1
      %p281 = scmp.lt.s32.totalorder %s278, 31
      %s282 = scalar_select %p281, %s278, 31
      %s283 = smul.addr %s280, 32
      %s284 = sadd.s32 %s282, %s283
      %s285 = smul.addr %s284, 8
      %s286 = scalar_lea.vmem %s7, %s285
      %p287 = scmp.lt.s32.totalorder %s22, 1
      %s288 = scalar_select %p287, %s22, 1
      %s289 = smul.addr %s288, 36
      %s290 = smul.addr %s289, 8
      %s291 = scalar_lea.vmem %s0, %s290
      %s292 = smul.u32 16, %s23
      %p293 = scmp.lt.s32.totalorder %s22, 1
      %s294 = scalar_select %p293, %s22, 1
      %p295 = scmp.lt.s32.totalorder %s292, 31
      %s296 = scalar_select %p295, %s292, 31
      %s297 = smul.addr %s294, 32
      %s298 = sadd.s32 %s296, %s297
      %s299 = smul.addr %s298, 8
      %s300 = scalar_lea.vmem %s7, %s299
      %s301 = smul.u32 16, %s23
      %s302 = smul.u32 %s23, 128
      %s303 = scalar_lea.vmem %s291, %s302
      %v304 = vld [vmem:[%s303] sm:$0xff]
      %v305 = vld [vmem:[%s303 + $0x8] sm:$0xff]
      %v306 = vld [vmem:[%s303 + $0x10] sm:$0xff]
      %v307 = vld [vmem:[%s303 + $0x18] sm:$0xff]
      %v308 = vld [vmem:[%s303 + $0x20] sm:$0xff]
      %v309 = vld [vmem:[%s303 + $0x28] sm:$0xff]
      %v310 = vld [vmem:[%s303 + $0x30] sm:$0xff]
      %v311 = vld [vmem:[%s303 + $0x38] sm:$0xff]
      %v312 = vld [vmem:[%s303 + $0x40] sm:$0xff]
      %v313 = vld [vmem:[%s303 + $0x48] sm:$0xff]
      %v314 = vld [vmem:[%s303 + $0x50] sm:$0xff]
      %v315 = vld [vmem:[%s303 + $0x58] sm:$0xff]
      %v316 = vld [vmem:[%s303 + $0x60] sm:$0xff]
      %v317 = vld [vmem:[%s303 + $0x68] sm:$0xff]
      %v318 = vld [vmem:[%s303 + $0x70] sm:$0xff]
      %v319 = vld [vmem:[%s303 + $0x78] sm:$0xff]
      %v320 = vld [vmem:[%s303 + $0x80] sm:$0xff]
      %v321 = vld [vmem:[%s303 + $0x88] sm:$0xff]
      %v322 = vld [vmem:[%s303 + $0x90] sm:$0xff]
      %v323 = vld [vmem:[%s303 + $0x98] sm:$0xff]
      %v324 = vld [vmem:[%s1] sm:$0xf]
      %v325 = vld [vmem:[%s2] sm:$0x1]
      %v327 = vlaneseq
      %v328 = vshrl.u32 %v327, 7
      %v329 = vsub.s32 0, %v328
      %v330 = vrot.slane %v325, %v329
      %vm332 = vcmask 31744
      %v334 = vsel %vm332, %v304, 0
      %v337 = vsel %vm332, %v305, 0
      %v340 = vsel %vm332, %v306, 0
      %v343 = vsel %vm332, %v307, 0
      %v346 = vsel %vm332, %v308, 0
      %v349 = vsel %vm332, %v309, 0
      %v352 = vsel %vm332, %v310, 0
      %v355 = vsel %vm332, %v311, 0
      %v358 = vsel %vm332, %v312, 0
      %v361 = vsel %vm332, %v313, 0
      %v364 = vsel %vm332, %v314, 0
      %v367 = vsel %vm332, %v315, 0
      %v370 = vsel %vm332, %v316, 0
      %v373 = vsel %vm332, %v317, 0
      %v376 = vsel %vm332, %v318, 0
      %v379 = vsel %vm332, %v319, 0
      %v382 = vsel %vm332, %v320, 0
      %v385 = vsel %vm332, %v321, 0
      %v388 = vsel %vm332, %v322, 0
      %v391 = vsel %vm332, %v323, 0
      %vm393 = vcmask 1043456
      %v395 = vsel %vm393, %v324, 0
      %397 = vmatprep.subr.mxu0 0.0
      %398 = vmatpush1.msra.mxu0 %v395
      %399 = vmatprep.subr.mxu0 0.0
      %400 = vmatpush1.msra.mxu0 0.0
      %401 = vmatprep.subr.mxu0 0.0
      %402 = vmatpush1.msra.mxu0 0.0
      %403 = vmatprep.subr.mxu0 0.0
      %404 = vmatpush1.msra.mxu0 0.0
      %405 = vmatprep.subr.mxu0 0.0
      %406 = vmatpush1.msra.mxu0 0.0
      %407 = vmatprep.subr.mxu0 0.0
      %408 = vmatpush1.msra.mxu0 0.0
      %409 = vmatprep.subr.mxu0 0.0
      %410 = vmatpush1.msra.mxu0 0.0
      %411 = vmatprep.subr.mxu0 0.0
      %412 = vmatpush1.msra.mxu0 0.0
      %413 = vmatprep.subr.mxu0 0.0
      %414 = vmatpush1.msra.mxu0 0.0
      %415 = vmatprep.subr.mxu0 0.0
      %416 = vmatpush1.msra.mxu0 0.0
      %417 = vmatprep.subr.mxu0 0.0
      %418 = vmatpush1.msra.mxu0 0.0
      %419 = vmatprep.subr.mxu0 0.0
      %420 = vmatpush1.msra.mxu0 0.0
      %421 = vmatprep.subr.mxu0 0.0
      %422 = vmatpush1.msra.mxu0 0.0
      %423 = vmatprep.subr.mxu0 0.0
      %424 = vmatpush1.msra.mxu0 0.0
      %425 = vmatprep.subr.mxu0 0.0
      %426 = vmatpush1.msra.mxu0 0.0
      %427 = vmatprep.subr.mxu0 0.0
      %428 = vmatpush1.msra.mxu0 0.0
      %429 = vmatprep.subr.mxu0 0.0
      %430 = vmatpush1.msra.mxu0 0.0
      %431 = vmatprep.subr.mxu0 0.0
      %432 = vmatpush1.msra.mxu0 0.0
      %433 = vmatprep.subr.mxu0 0.0
      %434 = vmatpush1.msra.mxu0 0.0
      %435 = vmatprep.subr.mxu0 0.0
      %436 = vmatpush1.msra.mxu0 0.0
      %437 = vmatprep.subr.mxu0 0.0
      %438 = vmatpush1.msra.mxu0 0.0
      %439 = vmatprep.subr.mxu0 0.0
      %440 = vmatpush1.msra.mxu0 0.0
      %441 = vmatprep.subr.mxu0 0.0
      %442 = vmatpush1.msra.mxu0 0.0
      %443 = vmatprep.subr.mxu0 0.0
      %444 = vmatpush1.msra.mxu0 0.0
      %445 = vmatprep.subr.mxu0 0.0
      %446 = vmatpush1.msra.mxu0 0.0
      %447 = vmatprep.subr.mxu0 0.0
      %448 = vmatpush1.msra.mxu0 0.0
      %449 = vmatprep.subr.mxu0 0.0
      %450 = vmatpush1.msra.mxu0 0.0
      %451 = vmatprep.subr.mxu0 0.0
      %452 = vmatpush1.msra.mxu0 0.0
      %453 = vmatprep.subr.mxu0 0.0
      %454 = vmatpush1.msra.mxu0 0.0
      %455 = vmatprep.subr.mxu0 0.0
      %456 = vmatpush1.msra.mxu0 0.0
      %457 = vmatprep.subr.mxu0 0.0
      %458 = vmatpush1.msra.mxu0 0.0
      %459 = vmatprep.subr.mxu0 0.0
      %460 = vmatpush1.msra.mxu0 0.0
      %461 = vmatprep.mubr.f32.mxu0 0.0
      %462 = vmatmul.mubr.f32.gmra.mrb[0].mxu0 %v334
      %v463 = vpop.f32.mrb[0].mxu0
      %v464 = vadd.f32 %v330, %v463
      %v465 = vpop.f32.mrb[0].mxu0
      %466 = vmatprep.mubr.f32.mxu0 0.0
      %467 = vmatmul.mubr.f32.gmra.mrb[0].mxu0 %v337
      %v468 = vpop.f32.mrb[0].mxu0
      %v469 = vadd.f32 %v330, %v468
      %v470 = vpop.f32.mrb[0].mxu0
      %471 = vmatprep.mubr.f32.mxu0 0.0
      %472 = vmatmul.mubr.f32.gmra.mrb[0].mxu0 %v340
      %v473 = vpop.f32.mrb[0].mxu0
      %v474 = vadd.f32 %v330, %v473
      %v475 = vpop.f32.mrb[0].mxu0
      %476 = vmatprep.mubr.f32.mxu0 0.0
      %477 = vmatmul.mubr.f32.gmra.mrb[0].mxu0 %v343
      %v478 = vpop.f32.mrb[0].mxu0
      %v479 = vadd.f32 %v330, %v478
      %v480 = vpop.f32.mrb[0].mxu0
      %481 = vmatprep.mubr.f32.mxu0 0.0
      %482 = vmatmul.mubr.f32.gmra.mrb[0].mxu0 %v346
      %v483 = vpop.f32.mrb[0].mxu0
      %v484 = vadd.f32 %v330, %v483
      %v485 = vpop.f32.mrb[0].mxu0
      %486 = vmatprep.mubr.f32.mxu0 0.0
      %487 = vmatmul.mubr.f32.gmra.mrb[0].mxu0 %v349
      %v488 = vpop.f32.mrb[0].mxu0
      %v489 = vadd.f32 %v330, %v488
      %v490 = vpop.f32.mrb[0].mxu0
      %491 = vmatprep.mubr.f32.mxu0 0.0
      %492 = vmatmul.mubr.f32.gmra.mrb[0].mxu0 %v352
      %v493 = vpop.f32.mrb[0].mxu0
      %v494 = vadd.f32 %v330, %v493
      %v495 = vpop.f32.mrb[0].mxu0
      %496 = vmatprep.mubr.f32.mxu0 0.0
      %497 = vmatmul.mubr.f32.gmra.mrb[0].mxu0 %v355
      %v498 = vpop.f32.mrb[0].mxu0
      %v499 = vadd.f32 %v330, %v498
      %v500 = vpop.f32.mrb[0].mxu0
      %501 = vmatprep.mubr.f32.mxu0 0.0
      %502 = vmatmul.mubr.f32.gmra.mrb[0].mxu0 %v358
      %v503 = vpop.f32.mrb[0].mxu0
      %v504 = vadd.f32 %v330, %v503
      %v505 = vpop.f32.mrb[0].mxu0
      %506 = vmatprep.mubr.f32.mxu0 0.0
      %507 = vmatmul.mubr.f32.gmra.mrb[0].mxu0 %v361
      %v508 = vpop.f32.mrb[0].mxu0
      %v509 = vadd.f32 %v330, %v508
      %v510 = vpop.f32.mrb[0].mxu0
      %511 = vmatprep.mubr.f32.mxu0 0.0
      %512 = vmatmul.mubr.f32.gmra.mrb[0].mxu0 %v364
      %v513 = vpop.f32.mrb[0].mxu0
      %v514 = vadd.f32 %v330, %v513
      %v515 = vpop.f32.mrb[0].mxu0
      %516 = vmatprep.mubr.f32.mxu0 0.0
      %517 = vmatmul.mubr.f32.gmra.mrb[0].mxu0 %v367
      %v518 = vpop.f32.mrb[0].mxu0
      %v519 = vadd.f32 %v330, %v518
      %v520 = vpop.f32.mrb[0].mxu0
      %521 = vmatprep.mubr.f32.mxu0 0.0
      %522 = vmatmul.mubr.f32.gmra.mrb[0].mxu0 %v370
      %v523 = vpop.f32.mrb[0].mxu0
      %v524 = vadd.f32 %v330, %v523
      %v525 = vpop.f32.mrb[0].mxu0
      %526 = vmatprep.mubr.f32.mxu0 0.0
      %527 = vmatmul.mubr.f32.gmra.mrb[0].mxu0 %v373
      %v528 = vpop.f32.mrb[0].mxu0
      %v529 = vadd.f32 %v330, %v528
      %v530 = vpop.f32.mrb[0].mxu0
      %531 = vmatprep.mubr.f32.mxu0 0.0
      %532 = vmatmul.mubr.f32.gmra.mrb[0].mxu0 %v376
      %v533 = vpop.f32.mrb[0].mxu0
      %v534 = vadd.f32 %v330, %v533
      %v535 = vpop.f32.mrb[0].mxu0
      %536 = vmatprep.mubr.f32.mxu0 0.0
      %537 = vmatmul.mubr.f32.gmra.mrb[0].mxu0 %v379
      %v538 = vpop.f32.mrb[0].mxu0
      %v539 = vadd.f32 %v330, %v538
      %v540 = vpop.f32.mrb[0].mxu0
      %541 = vmatprep.mubr.f32.mxu0 0.0
      %542 = vmatmul.mubr.f32.gmra.mrb[0].mxu0 %v382
      %v543 = vpop.f32.mrb[0].mxu0
      %v544 = vadd.f32 %v330, %v543
      %v545 = vpop.f32.mrb[0].mxu0
      %546 = vmatprep.mubr.f32.mxu0 0.0
      %547 = vmatmul.mubr.f32.gmra.mrb[0].mxu0 %v385
      %v548 = vpop.f32.mrb[0].mxu0
      %v549 = vadd.f32 %v330, %v548
      %v550 = vpop.f32.mrb[0].mxu0
      %551 = vmatprep.mubr.f32.mxu0 0.0
      %552 = vmatmul.mubr.f32.gmra.mrb[0].mxu0 %v388
      %v553 = vpop.f32.mrb[0].mxu0
      %v554 = vadd.f32 %v330, %v553
      %v555 = vpop.f32.mrb[0].mxu0
      %556 = vmatprep.mubr.f32.mxu0 0.0
      %557 = vmatmul.mubr.f32.gmra.mrb[0].mxu0 %v391
      %v558 = vpop.f32.mrb[0].mxu0
      %v559 = vadd.f32 %v330, %v558
      %v560 = vpop.f32.mrb[0].mxu0
      %561 = vdwg.mxu0
      %v562 = vmax.f32 %v464, 0.0
      %v563 = vmax.f32 %v469, 0.0
      %v564 = vmax.f32 %v474, 0.0
      %v565 = vmax.f32 %v479, 0.0
      %v566 = vmax.f32 %v484, 0.0
      %v567 = vmax.f32 %v489, 0.0
      %v568 = vmax.f32 %v494, 0.0
      %v569 = vmax.f32 %v499, 0.0
      %v570 = vmax.f32 %v504, 0.0
      %v571 = vmax.f32 %v509, 0.0
      %v572 = vmax.f32 %v514, 0.0
      %v573 = vmax.f32 %v519, 0.0
      %v574 = vmax.f32 %v524, 0.0
      %v575 = vmax.f32 %v529, 0.0
      %v576 = vmax.f32 %v534, 0.0
      %v577 = vmax.f32 %v539, 0.0
      %v578 = vmax.f32 %v544, 0.0
      %v579 = vmax.f32 %v549, 0.0
      %v580 = vmax.f32 %v554, 0.0
      %v581 = vmax.f32 %v559, 0.0
      %v582 = vmin.f32 %v562, 6.0
      %v583 = vmin.f32 %v563, 6.0
      %v584 = vmin.f32 %v564, 6.0
      %v585 = vmin.f32 %v565, 6.0
      %v586 = vmin.f32 %v566, 6.0
      %v587 = vmin.f32 %v567, 6.0
      %v588 = vmin.f32 %v568, 6.0
      %v589 = vmin.f32 %v569, 6.0
      %v590 = vmin.f32 %v570, 6.0
      %v591 = vmin.f32 %v571, 6.0
      %v592 = vmin.f32 %v572, 6.0
      %v593 = vmin.f32 %v573, 6.0
      %v594 = vmin.f32 %v574, 6.0
      %v595 = vmin.f32 %v575, 6.0
      %v596 = vmin.f32 %v576, 6.0
      %v597 = vmin.f32 %v577, 6.0
      %v598 = vmin.f32 %v578, 6.0
      %v599 = vmin.f32 %v579, 6.0
      %v600 = vmin.f32 %v580, 6.0
      %v601 = vmin.f32 %v581, 6.0
      %vm602 = vcmask 195584
      %603 = vst.msk [vmem:[#allocation2 + $0x8] sm:$0xff] %vm602, %v582
      %604 = vst.msk [vmem:[#allocation2 + $0x10] sm:$0xff] %vm602, %v583
      %605 = vst.msk [vmem:[#allocation2 + $0x28] sm:$0xff] %vm602, %v584
      %606 = vst.msk [vmem:[#allocation2 + $0x30] sm:$0xff] %vm602, %v585
      %607 = vst.msk [vmem:[#allocation2 + $0x48] sm:$0xff] %vm602, %v586
      %608 = vst.msk [vmem:[#allocation2 + $0x50] sm:$0xff] %vm602, %v587
      %609 = vst.msk [vmem:[#allocation2 + $0x68] sm:$0xff] %vm602, %v588
      %610 = vst.msk [vmem:[#allocation2 + $0x70] sm:$0xff] %vm602, %v589
      %611 = vst.msk [vmem:[#allocation2 + $0x88] sm:$0xff] %vm602, %v590
      %612 = vst.msk [vmem:[#allocation2 + $0x90] sm:$0xff] %vm602, %v591
      %613 = vst.msk [vmem:[#allocation2 + $0xa8] sm:$0xff] %vm602, %v592
      %614 = vst.msk [vmem:[#allocation2 + $0xb0] sm:$0xff] %vm602, %v593
      %615 = vst.msk [vmem:[#allocation2 + $0xc8] sm:$0xff] %vm602, %v594
      %616 = vst.msk [vmem:[#allocation2 + $0xd0] sm:$0xff] %vm602, %v595
      %617 = vst.msk [vmem:[#allocation2 + $0xe8] sm:$0xff] %vm602, %v596
      %618 = vst.msk [vmem:[#allocation2 + $0xf0] sm:$0xff] %vm602, %v597
      %619 = vst.msk [vmem:[#allocation2 + $0x108] sm:$0xff] %vm602, %v598
      %620 = vst.msk [vmem:[#allocation2 + $0x110] sm:$0xff] %vm602, %v599
      %621 = vst.msk [vmem:[#allocation2 + $0x128] sm:$0xff] %vm602, %v600
      %622 = vst.msk [vmem:[#allocation2 + $0x130] sm:$0xff] %vm602, %v601
      %p623 = scmp.eq.s32.totalorder %s23, 0
      // Predicated region
      $region49: #{tpu_custom_call.1} parent=47 // pred_check
        %p624 = pneg %p623
      $region50: #{tpu_custom_call.1} parent=47 // pred_check_branch
        %626 = sbr.rel (%p624) target = $region52
      $region51: #{tpu_custom_call.1} parent=47 // pred_region
        %627 = vst.msk [vmem:[#allocation2] sm:$0xff] %vm602, 0.0
        %628 = vst.msk [vmem:[#allocation2 + $0x8] sm:$0xff] %vm602, 0.0
        %629 = vst.msk [vmem:[#allocation2 + $0x10] sm:$0xff] %vm602, 0.0
        %vm630 = vcmask 188416
        %631 = vst.msk [vmem:[#allocation2 + $0x18] sm:$0x1] %vm630, 0.0
      $region52: #{tpu_custom_call.1} parent=47 // pred_fallthru
        _
      %p632 = scmp.eq.s32.totalorder %s23, 1
      // Predicated region
      $region53: #{tpu_custom_call.1} parent=47 // pred_check
        %p633 = pneg %p632
      $region54: #{tpu_custom_call.1} parent=47 // pred_check_branch
        %635 = sbr.rel (%p633) target = $region56
      $region55: #{tpu_custom_call.1} parent=47 // pred_region
        %s636 = scalar_lea.vmem [#allocation2], 288
        %637 = vst.msk [vmem:[%s636] sm:$0xff] %vm602, 0.0
        %638 = vst.msk [vmem:[%s636 + $0x8] sm:$0xff] %vm602, 0.0
        %639 = vst.msk [vmem:[%s636 + $0x10] sm:$0xff] %vm602, 0.0
        %vm640 = vcmask 188416
        %641 = vst.msk [vmem:[%s636 + $0x18] sm:$0x1] %vm640, 0.0
      $region56: #{tpu_custom_call.1} parent=47 // pred_fallthru
        _
      %vm642 = vcmask 188416
      %643 = vst.msk [vmem:[#allocation2 + $0x7] sm:$0x1] %vm642, 0.0
      %644 = vst.msk [vmem:[#allocation2 + $0x27] sm:$0x1] %vm642, 0.0
      %645 = vst.msk [vmem:[#allocation2 + $0x47] sm:$0x1] %vm642, 0.0
      %646 = vst.msk [vmem:[#allocation2 + $0x67] sm:$0x1] %vm642, 0.0
      %647 = vst.msk [vmem:[#allocation2 + $0x87] sm:$0x1] %vm642, 0.0
      %648 = vst.msk [vmem:[#allocation2 + $0xa7] sm:$0x1] %vm642, 0.0
      %649 = vst.msk [vmem:[#allocation2 + $0xc7] sm:$0x1] %vm642, 0.0
      %650 = vst.msk [vmem:[#allocation2 + $0xe7] sm:$0x1] %vm642, 0.0
      %651 = vst.msk [vmem:[#allocation2 + $0x107] sm:$0x1] %vm642, 0.0
      %652 = vst.msk [vmem:[#allocation2 + $0x127] sm:$0x1] %vm642, 0.0
      %653 = vst.msk [vmem:[#allocation2 + $0x18] sm:$0x1] %vm642, 0.0
      %654 = vst.msk [vmem:[#allocation2 + $0x38] sm:$0x1] %vm642, 0.0
      %655 = vst.msk [vmem:[#allocation2 + $0x58] sm:$0x1] %vm642, 0.0
      %656 = vst.msk [vmem:[#allocation2 + $0x78] sm:$0x1] %vm642, 0.0
      %657 = vst.msk [vmem:[#allocation2 + $0x98] sm:$0x1] %vm642, 0.0
      %658 = vst.msk [vmem:[#allocation2 + $0xb8] sm:$0x1] %vm642, 0.0
      %659 = vst.msk [vmem:[#allocation2 + $0xd8] sm:$0x1] %vm642, 0.0
      %660 = vst.msk [vmem:[#allocation2 + $0xf8] sm:$0x1] %vm642, 0.0
      %661 = vst.msk [vmem:[#allocation2 + $0x118] sm:$0x1] %vm642, 0.0
      %662 = vst.msk [vmem:[#allocation2 + $0x138] sm:$0x1] %vm642, 0.0
      %v663 = vld [vmem:[%s3] sm:$0xff]
      %v664 = vld [vmem:[%s3 + $0x8] sm:$0x1]
      %v665 = vld [vmem:[#allocation2 + $0x7] sm:$0xff]
      %v666 = vld [vmem:[#allocation2 + $0xf] sm:$0xff]
      %v667 = vld [vmem:[#allocation2 + $0x27] sm:$0xff]
      %v668 = vld [vmem:[#allocation2 + $0x2f] sm:$0xff]
      %v669 = vld [vmem:[#allocation2 + $0x47] sm:$0xff]
      %v670 = vld [vmem:[#allocation2 + $0x4f] sm:$0xff]
      %v671 = vld [vmem:[#allocation2 + $0x67] sm:$0xff]
      %v672 = vld [vmem:[#allocation2 + $0x6f] sm:$0xff]
      %v673 = vld [vmem:[#allocation2 + $0x87] sm:$0xff]
      %v674 = vld [vmem:[#allocation2 + $0x8f] sm:$0xff]
      %v675 = vld [vmem:[#allocation2 + $0xa7] sm:$0xff]
      %v676 = vld [vmem:[#allocation2 + $0xaf] sm:$0xff]
      %v677 = vld [vmem:[#allocation2 + $0xc7] sm:$0xff]
      %v678 = vld [vmem:[#allocation2 + $0xcf] sm:$0xff]
      %v679 = vld [vmem:[#allocation2 + $0xe7] sm:$0xff]
      %v680 = vld [vmem:[#allocation2 + $0xef] sm:$0xff]
      %v681 = vlaneseq
      %v682 = vshrl.u32 %v681, 7
      %v683 = vsub.s32 0, %v682
      %v684 = vrot.slane %v663, %v683
      %v685 = vmul.f32 %v665, %v684
      %v686 = vmul.f32 %v666, %v684
      %v687 = vmul.f32 %v667, %v684
      %v688 = vmul.f32 %v668, %v684
      %v689 = vmul.f32 %v669, %v684
      %v690 = vmul.f32 %v670, %v684
      %v691 = vmul.f32 %v671, %v684
      %v692 = vmul.f32 %v672, %v684
      %v693 = vmul.f32 %v673, %v684
      %v694 = vmul.f32 %v674, %v684
      %v695 = vmul.f32 %v675, %v684
      %v696 = vmul.f32 %v676, %v684
      %v697 = vmul.f32 %v677, %v684
      %v698 = vmul.f32 %v678, %v684
      %v699 = vmul.f32 %v679, %v684
      %v700 = vmul.f32 %v680, %v684
      %v701 = vadd.f32 %v685, 0.0
      %v702 = vadd.f32 %v686, 0.0
      %v703 = vadd.f32 %v687, 0.0
      %v704 = vadd.f32 %v688, 0.0
      %v705 = vadd.f32 %v689, 0.0
      %v706 = vadd.f32 %v690, 0.0
      %v707 = vadd.f32 %v691, 0.0
      %v708 = vadd.f32 %v692, 0.0
      %v709 = vadd.f32 %v693, 0.0
      %v710 = vadd.f32 %v694, 0.0
      %v711 = vadd.f32 %v695, 0.0
      %v712 = vadd.f32 %v696, 0.0
      %v713 = vadd.f32 %v697, 0.0
      %v714 = vadd.f32 %v698, 0.0
      %v715 = vadd.f32 %v699, 0.0
      %v716 = vadd.f32 %v700, 0.0
      %v717 = vld [vmem:[#allocation2 + $0x8] sm:$0xff]
      %v718 = vld [vmem:[#allocation2 + $0x10] sm:$0xff]
      %v719 = vld [vmem:[#allocation2 + $0x28] sm:$0xff]
      %v720 = vld [vmem:[#allocation2 + $0x30] sm:$0xff]
      %v721 = vld [vmem:[#allocation2 + $0x48] sm:$0xff]
      %v722 = vld [vmem:[#allocation2 + $0x50] sm:$0xff]
      %v723 = vld [vmem:[#allocation2 + $0x68] sm:$0xff]
      %v724 = vld [vmem:[#allocation2 + $0x70] sm:$0xff]
      %v725 = vld [vmem:[#allocation2 + $0x88] sm:$0xff]
      %v726 = vld [vmem:[#allocation2 + $0x90] sm:$0xff]
      %v727 = vld [vmem:[#allocation2 + $0xa8] sm:$0xff]
      %v728 = vld [vmem:[#allocation2 + $0xb0] sm:$0xff]
      %v729 = vld [vmem:[#allocation2 + $0xc8] sm:$0xff]
      %v730 = vld [vmem:[#allocation2 + $0xd0] sm:$0xff]
      %v731 = vld [vmem:[#allocation2 + $0xe8] sm:$0xff]
      %v732 = vld [vmem:[#allocation2 + $0xf0] sm:$0xff]
      %v733 = vlaneseq
      %v734 = vshrl.u32 %v733, 7
      %v735 = vsub.s32 1, %v734
      %v736 = vrot.slane %v663, %v735
      %v737 = vmul.f32 %v717, %v736
      %v738 = vmul.f32 %v718, %v736
      %v739 = vmul.f32 %v719, %v736
      %v740 = vmul.f32 %v720, %v736
      %v741 = vmul.f32 %v721, %v736
      %v742 = vmul.f32 %v722, %v736
      %v743 = vmul.f32 %v723, %v736
      %v744 = vmul.f32 %v724, %v736
      %v745 = vmul.f32 %v725, %v736
      %v746 = vmul.f32 %v726, %v736
      %v747 = vmul.f32 %v727, %v736
      %v748 = vmul.f32 %v728, %v736
      %v749 = vmul.f32 %v729, %v736
      %v750 = vmul.f32 %v730, %v736
      %v751 = vmul.f32 %v731, %v736
      %v752 = vmul.f32 %v732, %v736
      %v753 = vadd.f32 %v701, %v737
      %v754 = vadd.f32 %v702, %v738
      %v755 = vadd.f32 %v703, %v739
      %v756 = vadd.f32 %v704, %v740
      %v757 = vadd.f32 %v705, %v741
      %v758 = vadd.f32 %v706, %v742
      %v759 = vadd.f32 %v707, %v743
      %v760 = vadd.f32 %v708, %v744
      %v761 = vadd.f32 %v709, %v745
      %v762 = vadd.f32 %v710, %v746
      %v763 = vadd.f32 %v711, %v747
      %v764 = vadd.f32 %v712, %v748
      %v765 = vadd.f32 %v713, %v749
      %v766 = vadd.f32 %v714, %v750
      %v767 = vadd.f32 %v715, %v751
      %v768 = vadd.f32 %v716, %v752
      %v769 = vld [vmem:[#allocation2 + $0x9] sm:$0xff]
      %v770 = vld [vmem:[#allocation2 + $0x11] sm:$0xff]
      %v771 = vld [vmem:[#allocation2 + $0x29] sm:$0xff]
      %v772 = vld [vmem:[#allocation2 + $0x31] sm:$0xff]
      %v773 = vld [vmem:[#allocation2 + $0x49] sm:$0xff]
      %v774 = vld [vmem:[#allocation2 + $0x51] sm:$0xff]
      %v775 = vld [vmem:[#allocation2 + $0x69] sm:$0xff]
      %v776 = vld [vmem:[#allocation2 + $0x71] sm:$0xff]
      %v777 = vld [vmem:[#allocation2 + $0x89] sm:$0xff]
      %v778 = vld [vmem:[#allocation2 + $0x91] sm:$0xff]
      %v779 = vld [vmem:[#allocation2 + $0xa9] sm:$0xff]
      %v780 = vld [vmem:[#allocation2 + $0xb1] sm:$0xff]
      %v781 = vld [vmem:[#allocation2 + $0xc9] sm:$0xff]
      %v782 = vld [vmem:[#allocation2 + $0xd1] sm:$0xff]
      %v783 = vld [vmem:[#allocation2 + $0xe9] sm:$0xff]
      %v784 = vld [vmem:[#allocation2 + $0xf1] sm:$0xff]
      %v785 = vlaneseq
      %v786 = vshrl.u32 %v785, 7
      %v787 = vsub.s32 2, %v786
      %v788 = vrot.slane %v663, %v787
      %v789 = vmul.f32 %v769, %v788
      %v790 = vmul.f32 %v770, %v788
      %v791 = vmul.f32 %v771, %v788
      %v792 = vmul.f32 %v772, %v788
      %v793 = vmul.f32 %v773, %v788
      %v794 = vmul.f32 %v774, %v788
      %v795 = vmul.f32 %v775, %v788
      %v796 = vmul.f32 %v776, %v788
      %v797 = vmul.f32 %v777, %v788
      %v798 = vmul.f32 %v778, %v788
      %v799 = vmul.f32 %v779, %v788
      %v800 = vmul.f32 %v780, %v788
      %v801 = vmul.f32 %v781, %v788
      %v802 = vmul.f32 %v782, %v788
      %v803 = vmul.f32 %v783, %v788
      %v804 = vmul.f32 %v784, %v788
      %v805 = vadd.f32 %v753, %v789
      %v806 = vadd.f32 %v754, %v790
      %v807 = vadd.f32 %v755, %v791
      %v808 = vadd.f32 %v756, %v792
      %v809 = vadd.f32 %v757, %v793
      %v810 = vadd.f32 %v758, %v794
      %v811 = vadd.f32 %v759, %v795
      %v812 = vadd.f32 %v760, %v796
      %v813 = vadd.f32 %v761, %v797
      %v814 = vadd.f32 %v762, %v798
      %v815 = vadd.f32 %v763, %v799
      %v816 = vadd.f32 %v764, %v800
      %v817 = vadd.f32 %v765, %v801
      %v818 = vadd.f32 %v766, %v802
      %v819 = vadd.f32 %v767, %v803
      %v820 = vadd.f32 %v768, %v804
      %s821 = scalar_lea.vmem [#allocation2], 32
      %v822 = vld [vmem:[%s821 + $0x7] sm:$0xff]
      %v823 = vld [vmem:[%s821 + $0xf] sm:$0xff]
      %v824 = vld [vmem:[%s821 + $0x27] sm:$0xff]
      %v825 = vld [vmem:[%s821 + $0x2f] sm:$0xff]
      %v826 = vld [vmem:[%s821 + $0x47] sm:$0xff]
      %v827 = vld [vmem:[%s821 + $0x4f] sm:$0xff]
      %v828 = vld [vmem:[%s821 + $0x67] sm:$0xff]
      %v829 = vld [vmem:[%s821 + $0x6f] sm:$0xff]
      %v830 = vld [vmem:[%s821 + $0x87] sm:$0xff]
      %v831 = vld [vmem:[%s821 + $0x8f] sm:$0xff]
      %v832 = vld [vmem:[%s821 + $0xa7] sm:$0xff]
      %v833 = vld [vmem:[%s821 + $0xaf] sm:$0xff]
      %v834 = vld [vmem:[%s821 + $0xc7] sm:$0xff]
      %v835 = vld [vmem:[%s821 + $0xcf] sm:$0xff]
      %v836 = vld [vmem:[%s821 + $0xe7] sm:$0xff]
      %v837 = vld [vmem:[%s821 + $0xef] sm:$0xff]
      %v838 = vlaneseq
      %v839 = vshrl.u32 %v838, 7
      %v840 = vsub.s32 3, %v839
      %v841 = vrot.slane %v663, %v840
      %v842 = vmul.f32 %v822, %v841
      %v843 = vmul.f32 %v823, %v841
      %v844 = vmul.f32 %v824, %v841
      %v845 = vmul.f32 %v825, %v841
      %v846 = vmul.f32 %v826, %v841
      %v847 = vmul.f32 %v827, %v841
      %v848 = vmul.f32 %v828, %v841
      %v849 = vmul.f32 %v829, %v841
      %v850 = vmul.f32 %v830, %v841
      %v851 = vmul.f32 %v831, %v841
      %v852 = vmul.f32 %v832, %v841
      %v853 = vmul.f32 %v833, %v841
      %v854 = vmul.f32 %v834, %v841
      %v855 = vmul.f32 %v835, %v841
      %v856 = vmul.f32 %v836, %v841
      %v857 = vmul.f32 %v837, %v841
      %v858 = vadd.f32 %v805, %v842
      %v859 = vadd.f32 %v806, %v843
      %v860 = vadd.f32 %v807, %v844
      %v861 = vadd.f32 %v808, %v845
      %v862 = vadd.f32 %v809, %v846
      %v863 = vadd.f32 %v810, %v847
      %v864 = vadd.f32 %v811, %v848
      %v865 = vadd.f32 %v812, %v849
      %v866 = vadd.f32 %v813, %v850
      %v867 = vadd.f32 %v814, %v851
      %v868 = vadd.f32 %v815, %v852
      %v869 = vadd.f32 %v816, %v853
      %v870 = vadd.f32 %v817, %v854
      %v871 = vadd.f32 %v818, %v855
      %v872 = vadd.f32 %v819, %v856
      %v873 = vadd.f32 %v820, %v857
      %v874 = vld [vmem:[%s821 + $0x8] sm:$0xff]
      %v875 = vld [vmem:[%s821 + $0x10] sm:$0xff]
      %v876 = vld [vmem:[%s821 + $0x28] sm:$0xff]
      %v877 = vld [vmem:[%s821 + $0x30] sm:$0xff]
      %v878 = vld [vmem:[%s821 + $0x48] sm:$0xff]
      %v879 = vld [vmem:[%s821 + $0x50] sm:$0xff]
      %v880 = vld [vmem:[%s821 + $0x68] sm:$0xff]
      %v881 = vld [vmem:[%s821 + $0x70] sm:$0xff]
      %v882 = vld [vmem:[%s821 + $0x88] sm:$0xff]
      %v883 = vld [vmem:[%s821 + $0x90] sm:$0xff]
      %v884 = vld [vmem:[%s821 + $0xa8] sm:$0xff]
      %v885 = vld [vmem:[%s821 + $0xb0] sm:$0xff]
      %v886 = vld [vmem:[%s821 + $0xc8] sm:$0xff]
      %v887 = vld [vmem:[%s821 + $0xd0] sm:$0xff]
      %v888 = vld [vmem:[%s821 + $0xe8] sm:$0xff]
      %v889 = vld [vmem:[%s821 + $0xf0] sm:$0xff]
      %v890 = vlaneseq
      %v891 = vshrl.u32 %v890, 7
      %v892 = vsub.s32 4, %v891
      %v893 = vrot.slane %v663, %v892
      %v894 = vmul.f32 %v874, %v893
      %v895 = vmul.f32 %v875, %v893
      %v896 = vmul.f32 %v876, %v893
      %v897 = vmul.f32 %v877, %v893
      %v898 = vmul.f32 %v878, %v893
      %v899 = vmul.f32 %v879, %v893
      %v900 = vmul.f32 %v880, %v893
      %v901 = vmul.f32 %v881, %v893
      %v902 = vmul.f32 %v882, %v893
      %v903 = vmul.f32 %v883, %v893
      %v904 = vmul.f32 %v884, %v893
      %v905 = vmul.f32 %v885, %v893
      %v906 = vmul.f32 %v886, %v893
      %v907 = vmul.f32 %v887, %v893
      %v908 = vmul.f32 %v888, %v893
      %v909 = vmul.f32 %v889, %v893
      %v910 = vadd.f32 %v858, %v894
      %v911 = vadd.f32 %v859, %v895
      %v912 = vadd.f32 %v860, %v896
      %v913 = vadd.f32 %v861, %v897
      %v914 = vadd.f32 %v862, %v898
      %v915 = vadd.f32 %v863, %v899
      %v916 = vadd.f32 %v864, %v900
      %v917 = vadd.f32 %v865, %v901
      %v918 = vadd.f32 %v866, %v902
      %v919 = vadd.f32 %v867, %v903
      %v920 = vadd.f32 %v868, %v904
      %v921 = vadd.f32 %v869, %v905
      %v922 = vadd.f32 %v870, %v906
      %v923 = vadd.f32 %v871, %v907
      %v924 = vadd.f32 %v872, %v908
      %v925 = vadd.f32 %v873, %v909
      %v926 = vld [vmem:[%s821 + $0x9] sm:$0xff]
      %v927 = vld [vmem:[%s821 + $0x11] sm:$0xff]
      %v928 = vld [vmem:[%s821 + $0x29] sm:$0xff]
      %v929 = vld [vmem:[%s821 + $0x31] sm:$0xff]
      %v930 = vld [vmem:[%s821 + $0x49] sm:$0xff]
      %v931 = vld [vmem:[%s821 + $0x51] sm:$0xff]
      %v932 = vld [vmem:[%s821 + $0x69] sm:$0xff]
      %v933 = vld [vmem:[%s821 + $0x71] sm:$0xff]
      %v934 = vld [vmem:[%s821 + $0x89] sm:$0xff]
      %v935 = vld [vmem:[%s821 + $0x91] sm:$0xff]
      %v936 = vld [vmem:[%s821 + $0xa9] sm:$0xff]
      %v937 = vld [vmem:[%s821 + $0xb1] sm:$0xff]
      %v938 = vld [vmem:[%s821 + $0xc9] sm:$0xff]
      %v939 = vld [vmem:[%s821 + $0xd1] sm:$0xff]
      %v940 = vld [vmem:[%s821 + $0xe9] sm:$0xff]
      %v941 = vld [vmem:[%s821 + $0xf1] sm:$0xff]
      %v942 = vlaneseq
      %v943 = vshrl.u32 %v942, 7
      %v944 = vsub.s32 5, %v943
      %v945 = vrot.slane %v663, %v944
      %v946 = vmul.f32 %v926, %v945
      %v947 = vmul.f32 %v927, %v945
      %v948 = vmul.f32 %v928, %v945
      %v949 = vmul.f32 %v929, %v945
      %v950 = vmul.f32 %v930, %v945
      %v951 = vmul.f32 %v931, %v945
      %v952 = vmul.f32 %v932, %v945
      %v953 = vmul.f32 %v933, %v945
      %v954 = vmul.f32 %v934, %v945
      %v955 = vmul.f32 %v935, %v945
      %v956 = vmul.f32 %v936, %v945
      %v957 = vmul.f32 %v937, %v945
      %v958 = vmul.f32 %v938, %v945
      %v959 = vmul.f32 %v939, %v945
      %v960 = vmul.f32 %v940, %v945
      %v961 = vmul.f32 %v941, %v945
      %v962 = vadd.f32 %v910, %v946
      %v963 = vadd.f32 %v911, %v947
      %v964 = vadd.f32 %v912, %v948
      %v965 = vadd.f32 %v913, %v949
      %v966 = vadd.f32 %v914, %v950
      %v967 = vadd.f32 %v915, %v951
      %v968 = vadd.f32 %v916, %v952
      %v969 = vadd.f32 %v917, %v953
      %v970 = vadd.f32 %v918, %v954
      %v971 = vadd.f32 %v919, %v955
      %v972 = vadd.f32 %v920, %v956
      %v973 = vadd.f32 %v921, %v957
      %v974 = vadd.f32 %v922, %v958
      %v975 = vadd.f32 %v923, %v959
      %v976 = vadd.f32 %v924, %v960
      %v977 = vadd.f32 %v925, %v961
      %s978 = scalar_lea.vmem [#allocation2], 64
      %v979 = vld [vmem:[%s978 + $0x7] sm:$0xff]
      %v980 = vld [vmem:[%s978 + $0xf] sm:$0xff]
      %v981 = vld [vmem:[%s978 + $0x27] sm:$0xff]
      %v982 = vld [vmem:[%s978 + $0x2f] sm:$0xff]
      %v983 = vld [vmem:[%s978 + $0x47] sm:$0xff]
      %v984 = vld [vmem:[%s978 + $0x4f] sm:$0xff]
      %v985 = vld [vmem:[%s978 + $0x67] sm:$0xff]
      %v986 = vld [vmem:[%s978 + $0x6f] sm:$0xff]
      %v987 = vld [vmem:[%s978 + $0x87] sm:$0xff]
      %v988 = vld [vmem:[%s978 + $0x8f] sm:$0xff]
      %v989 = vld [vmem:[%s978 + $0xa7] sm:$0xff]
      %v990 = vld [vmem:[%s978 + $0xaf] sm:$0xff]
      %v991 = vld [vmem:[%s978 + $0xc7] sm:$0xff]
      %v992 = vld [vmem:[%s978 + $0xcf] sm:$0xff]
      %v993 = vld [vmem:[%s978 + $0xe7] sm:$0xff]
      %v994 = vld [vmem:[%s978 + $0xef] sm:$0xff]
      %v995 = vlaneseq
      %v996 = vshrl.u32 %v995, 7
      %v997 = vsub.s32 6, %v996
      %v998 = vrot.slane %v663, %v997
      %v999 = vmul.f32 %v979, %v998
      %v1000 = vmul.f32 %v980, %v998
      %v1001 = vmul.f32 %v981, %v998
      %v1002 = vmul.f32 %v982, %v998
      %v1003 = vmul.f32 %v983, %v998
      %v1004 = vmul.f32 %v984, %v998
      %v1005 = vmul.f32 %v985, %v998
      %v1006 = vmul.f32 %v986, %v998
      %v1007 = vmul.f32 %v987, %v998
      %v1008 = vmul.f32 %v988, %v998
      %v1009 = vmul.f32 %v989, %v998
      %v1010 = vmul.f32 %v990, %v998
      %v1011 = vmul.f32 %v991, %v998
      %v1012 = vmul.f32 %v992, %v998
      %v1013 = vmul.f32 %v993, %v998
      %v1014 = vmul.f32 %v994, %v998
      %v1015 = vadd.f32 %v962, %v999
      %v1016 = vadd.f32 %v963, %v1000
      %v1017 = vadd.f32 %v964, %v1001
      %v1018 = vadd.f32 %v965, %v1002
      %v1019 = vadd.f32 %v966, %v1003
      %v1020 = vadd.f32 %v967, %v1004
      %v1021 = vadd.f32 %v968, %v1005
      %v1022 = vadd.f32 %v969, %v1006
      %v1023 = vadd.f32 %v970, %v1007
      %v1024 = vadd.f32 %v971, %v1008
      %v1025 = vadd.f32 %v972, %v1009
      %v1026 = vadd.f32 %v973, %v1010
      %v1027 = vadd.f32 %v974, %v1011
      %v1028 = vadd.f32 %v975, %v1012
      %v1029 = vadd.f32 %v976, %v1013
      %v1030 = vadd.f32 %v977, %v1014
      %v1031 = vld [vmem:[%s978 + $0x8] sm:$0xff]
      %v1032 = vld [vmem:[%s978 + $0x10] sm:$0xff]
      %v1033 = vld [vmem:[%s978 + $0x28] sm:$0xff]
      %v1034 = vld [vmem:[%s978 + $0x30] sm:$0xff]
      %v1035 = vld [vmem:[%s978 + $0x48] sm:$0xff]
      %v1036 = vld [vmem:[%s978 + $0x50] sm:$0xff]
      %v1037 = vld [vmem:[%s978 + $0x68] sm:$0xff]
      %v1038 = vld [vmem:[%s978 + $0x70] sm:$0xff]
      %v1039 = vld [vmem:[%s978 + $0x88] sm:$0xff]
      %v1040 = vld [vmem:[%s978 + $0x90] sm:$0xff]
      %v1041 = vld [vmem:[%s978 + $0xa8] sm:$0xff]
      %v1042 = vld [vmem:[%s978 + $0xb0] sm:$0xff]
      %v1043 = vld [vmem:[%s978 + $0xc8] sm:$0xff]
      %v1044 = vld [vmem:[%s978 + $0xd0] sm:$0xff]
      %v1045 = vld [vmem:[%s978 + $0xe8] sm:$0xff]
      %v1046 = vld [vmem:[%s978 + $0xf0] sm:$0xff]
      %v1047 = vlaneseq
      %v1048 = vshrl.u32 %v1047, 7
      %v1049 = vsub.s32 7, %v1048
      %v1050 = vrot.slane %v663, %v1049
      %v1051 = vmul.f32 %v1031, %v1050
      %v1052 = vmul.f32 %v1032, %v1050
      %v1053 = vmul.f32 %v1033, %v1050
      %v1054 = vmul.f32 %v1034, %v1050
      %v1055 = vmul.f32 %v1035, %v1050
      %v1056 = vmul.f32 %v1036, %v1050
      %v1057 = vmul.f32 %v1037, %v1050
      %v1058 = vmul.f32 %v1038, %v1050
      %v1059 = vmul.f32 %v1039, %v1050
      %v1060 = vmul.f32 %v1040, %v1050
      %v1061 = vmul.f32 %v1041, %v1050
      %v1062 = vmul.f32 %v1042, %v1050
      %v1063 = vmul.f32 %v1043, %v1050
      %v1064 = vmul.f32 %v1044, %v1050
      %v1065 = vmul.f32 %v1045, %v1050
      %v1066 = vmul.f32 %v1046, %v1050
      %v1067 = vadd.f32 %v1015, %v1051
      %v1068 = vadd.f32 %v1016, %v1052
      %v1069 = vadd.f32 %v1017, %v1053
      %v1070 = vadd.f32 %v1018, %v1054
      %v1071 = vadd.f32 %v1019, %v1055
      %v1072 = vadd.f32 %v1020, %v1056
      %v1073 = vadd.f32 %v1021, %v1057
      %v1074 = vadd.f32 %v1022, %v1058
      %v1075 = vadd.f32 %v1023, %v1059
      %v1076 = vadd.f32 %v1024, %v1060
      %v1077 = vadd.f32 %v1025, %v1061
      %v1078 = vadd.f32 %v1026, %v1062
      %v1079 = vadd.f32 %v1027, %v1063
      %v1080 = vadd.f32 %v1028, %v1064
      %v1081 = vadd.f32 %v1029, %v1065
      %v1082 = vadd.f32 %v1030, %v1066
      %v1083 = vld [vmem:[%s978 + $0x9] sm:$0xff]
      %v1084 = vld [vmem:[%s978 + $0x11] sm:$0xff]
      %v1085 = vld [vmem:[%s978 + $0x29] sm:$0xff]
      %v1086 = vld [vmem:[%s978 + $0x31] sm:$0xff]
      %v1087 = vld [vmem:[%s978 + $0x49] sm:$0xff]
      %v1088 = vld [vmem:[%s978 + $0x51] sm:$0xff]
      %v1089 = vld [vmem:[%s978 + $0x69] sm:$0xff]
      %v1090 = vld [vmem:[%s978 + $0x71] sm:$0xff]
      %v1091 = vld [vmem:[%s978 + $0x89] sm:$0xff]
      %v1092 = vld [vmem:[%s978 + $0x91] sm:$0xff]
      %v1093 = vld [vmem:[%s978 + $0xa9] sm:$0xff]
      %v1094 = vld [vmem:[%s978 + $0xb1] sm:$0xff]
      %v1095 = vld [vmem:[%s978 + $0xc9] sm:$0xff]
      %v1096 = vld [vmem:[%s978 + $0xd1] sm:$0xff]
      %v1097 = vld [vmem:[%s978 + $0xe9] sm:$0xff]
      %v1098 = vld [vmem:[%s978 + $0xf1] sm:$0xff]
      %v1099 = vlaneseq
      %v1100 = vshrl.u32 %v1099, 7
      %v1101 = vsub.s32 0, %v1100
      %v1102 = vrot.slane %v664, %v1101
      %v1103 = vmul.f32 %v1083, %v1102
      %v1104 = vmul.f32 %v1084, %v1102
      %v1105 = vmul.f32 %v1085, %v1102
      %v1106 = vmul.f32 %v1086, %v1102
      %v1107 = vmul.f32 %v1087, %v1102
      %v1108 = vmul.f32 %v1088, %v1102
      %v1109 = vmul.f32 %v1089, %v1102
      %v1110 = vmul.f32 %v1090, %v1102
      %v1111 = vmul.f32 %v1091, %v1102
      %v1112 = vmul.f32 %v1092, %v1102
      %v1113 = vmul.f32 %v1093, %v1102
      %v1114 = vmul.f32 %v1094, %v1102
      %v1115 = vmul.f32 %v1095, %v1102
      %v1116 = vmul.f32 %v1096, %v1102
      %v1117 = vmul.f32 %v1097, %v1102
      %v1118 = vmul.f32 %v1098, %v1102
      %v1119 = vadd.f32 %v1067, %v1103
      %v1120 = vadd.f32 %v1068, %v1104
      %v1121 = vadd.f32 %v1069, %v1105
      %v1122 = vadd.f32 %v1070, %v1106
      %v1123 = vadd.f32 %v1071, %v1107
      %v1124 = vadd.f32 %v1072, %v1108
      %v1125 = vadd.f32 %v1073, %v1109
      %v1126 = vadd.f32 %v1074, %v1110
      %v1127 = vadd.f32 %v1075, %v1111
      %v1128 = vadd.f32 %v1076, %v1112
      %v1129 = vadd.f32 %v1077, %v1113
      %v1130 = vadd.f32 %v1078, %v1114
      %v1131 = vadd.f32 %v1079, %v1115
      %v1132 = vadd.f32 %v1080, %v1116
      %v1133 = vadd.f32 %v1081, %v1117
      %v1134 = vadd.f32 %v1082, %v1118
      %v1135 = vld [vmem:[%s4] sm:$0x1]
      %v1137 = vlaneseq
      %v1138 = vshrl.u32 %v1137, 7
      %v1139 = vsub.s32 0, %v1138
      %v1140 = vrot.slane %v1135, %v1139
      %v1142 = vadd.f32 %v1119, %v1140
      %v1143 = vadd.f32 %v1120, %v1140
      %v1144 = vadd.f32 %v1121, %v1140
      %v1145 = vadd.f32 %v1122, %v1140
      %v1146 = vadd.f32 %v1123, %v1140
      %v1147 = vadd.f32 %v1124, %v1140
      %v1148 = vadd.f32 %v1125, %v1140
      %v1149 = vadd.f32 %v1126, %v1140
      %v1150 = vadd.f32 %v1127, %v1140
      %v1151 = vadd.f32 %v1128, %v1140
      %v1152 = vadd.f32 %v1129, %v1140
      %v1153 = vadd.f32 %v1130, %v1140
      %v1154 = vadd.f32 %v1131, %v1140
      %v1155 = vadd.f32 %v1132, %v1140
      %v1156 = vadd.f32 %v1133, %v1140
      %v1157 = vadd.f32 %v1134, %v1140
      %v1158 = vmax.f32 %v1142, 0.0
      %v1159 = vmax.f32 %v1143, 0.0
      %v1160 = vmax.f32 %v1144, 0.0
      %v1161 = vmax.f32 %v1145, 0.0
      %v1162 = vmax.f32 %v1146, 0.0
      %v1163 = vmax.f32 %v1147, 0.0
      %v1164 = vmax.f32 %v1148, 0.0
      %v1165 = vmax.f32 %v1149, 0.0
      %v1166 = vmax.f32 %v1150, 0.0
      %v1167 = vmax.f32 %v1151, 0.0
      %v1168 = vmax.f32 %v1152, 0.0
      %v1169 = vmax.f32 %v1153, 0.0
      %v1170 = vmax.f32 %v1154, 0.0
      %v1171 = vmax.f32 %v1155, 0.0
      %v1172 = vmax.f32 %v1156, 0.0
      %v1173 = vmax.f32 %v1157, 0.0
      %v1174 = vmin.f32 %v1158, 6.0
      %v1175 = vmin.f32 %v1159, 6.0
      %v1176 = vmin.f32 %v1160, 6.0
      %v1177 = vmin.f32 %v1161, 6.0
      %v1178 = vmin.f32 %v1162, 6.0
      %v1179 = vmin.f32 %v1163, 6.0
      %v1180 = vmin.f32 %v1164, 6.0
      %v1181 = vmin.f32 %v1165, 6.0
      %v1182 = vmin.f32 %v1166, 6.0
      %v1183 = vmin.f32 %v1167, 6.0
      %v1184 = vmin.f32 %v1168, 6.0
      %v1185 = vmin.f32 %v1169, 6.0
      %v1186 = vmin.f32 %v1170, 6.0
      %v1187 = vmin.f32 %v1171, 6.0
      %v1188 = vmin.f32 %v1172, 6.0
      %v1189 = vmin.f32 %v1173, 6.0
      %v1190 = vld [vmem:[%s5] sm:$0xff]
      %v1191 = vld [vmem:[%s5 + $0x8] sm:$0xff]
      %v1192 = vld [vmem:[%s5 + $0x10] sm:$0xff]
      %v1193 = vld [vmem:[%s6] sm:$0x1]
      %v1195 = vlaneseq
      %v1196 = vshrl.u32 %v1195, 7
      %v1197 = vsub.s32 0, %v1196
      %v1198 = vrot.slane %v1193, %v1197
      %v1201 = vsel %vm602, %v1174, 0
      %v1204 = vsel %vm602, %v1175, 0
      %v1207 = vsel %vm602, %v1176, 0
      %v1210 = vsel %vm602, %v1177, 0
      %v1213 = vsel %vm602, %v1178, 0
      %v1216 = vsel %vm602, %v1179, 0
      %v1219 = vsel %vm602, %v1180, 0
      %v1222 = vsel %vm602, %v1181, 0
      %v1225 = vsel %vm602, %v1182, 0
      %v1228 = vsel %vm602, %v1183, 0
      %v1231 = vsel %vm602, %v1184, 0
      %v1234 = vsel %vm602, %v1185, 0
      %v1237 = vsel %vm602, %v1186, 0
      %v1240 = vsel %vm602, %v1187, 0
      %v1243 = vsel %vm602, %v1188, 0
      %v1246 = vsel %vm602, %v1189, 0
      %1248 = vmatprep.subr.mxu0 0.0
      %1249 = vmatpush1.msra.mxu0 %v1190
      %1250 = vmatprep.subr.mxu0 0.0
      %1251 = vmatpush1.msra.mxu0 %v1191
      %1252 = vmatprep.subr.mxu0 0.0
      %1253 = vmatpush1.msra.mxu0 %v1192
      %1254 = vmatprep.subr.mxu0 0.0
      %1255 = vmatpush1.msra.mxu0 0.0
      %1256 = vmatprep.subr.mxu0 0.0
      %1257 = vmatpush1.msra.mxu0 0.0
      %1258 = vmatprep.subr.mxu0 0.0
      %1259 = vmatpush1.msra.mxu0 0.0
      %1260 = vmatprep.subr.mxu0 0.0
      %1261 = vmatpush1.msra.mxu0 0.0
      %1262 = vmatprep.subr.mxu0 0.0
      %1263 = vmatpush1.msra.mxu0 0.0
      %1264 = vmatprep.subr.mxu0 0.0
      %1265 = vmatpush1.msra.mxu0 0.0
      %1266 = vmatprep.subr.mxu0 0.0
      %1267 = vmatpush1.msra.mxu0 0.0
      %1268 = vmatprep.subr.mxu0 0.0
      %1269 = vmatpush1.msra.mxu0 0.0
      %1270 = vmatprep.subr.mxu0 0.0
      %1271 = vmatpush1.msra.mxu0 0.0
      %1272 = vmatprep.subr.mxu0 0.0
      %1273 = vmatpush1.msra.mxu0 0.0
      %1274 = vmatprep.subr.mxu0 0.0
      %1275 = vmatpush1.msra.mxu0 0.0
      %1276 = vmatprep.subr.mxu0 0.0
      %1277 = vmatpush1.msra.mxu0 0.0
      %1278 = vmatprep.subr.mxu0 0.0
      %1279 = vmatpush1.msra.mxu0 0.0
      %1280 = vmatprep.subr.mxu0 0.0
      %1281 = vmatpush1.msra.mxu0 0.0
      %1282 = vmatprep.subr.mxu0 0.0
      %1283 = vmatpush1.msra.mxu0 0.0
      %1284 = vmatprep.subr.mxu0 0.0
      %1285 = vmatpush1.msra.mxu0 0.0
      %1286 = vmatprep.subr.mxu0 0.0
      %1287 = vmatpush1.msra.mxu0 0.0
      %1288 = vmatprep.subr.mxu0 0.0
      %1289 = vmatpush1.msra.mxu0 0.0
      %1290 = vmatprep.subr.mxu0 0.0
      %1291 = vmatpush1.msra.mxu0 0.0
      %1292 = vmatprep.subr.mxu0 0.0
      %1293 = vmatpush1.msra.mxu0 0.0
      %1294 = vmatprep.subr.mxu0 0.0
      %1295 = vmatpush1.msra.mxu0 0.0
      %1296 = vmatprep.subr.mxu0 0.0
      %1297 = vmatpush1.msra.mxu0 0.0
      %1298 = vmatprep.subr.mxu0 0.0
      %1299 = vmatpush1.msra.mxu0 0.0
      %1300 = vmatprep.subr.mxu0 0.0
      %1301 = vmatpush1.msra.mxu0 0.0
      %1302 = vmatprep.subr.mxu0 0.0
      %1303 = vmatpush1.msra.mxu0 0.0
      %1304 = vmatprep.subr.mxu0 0.0
      %1305 = vmatpush1.msra.mxu0 0.0
      %1306 = vmatprep.subr.mxu0 0.0
      %1307 = vmatpush1.msra.mxu0 0.0
      %1308 = vmatprep.subr.mxu0 0.0
      %1309 = vmatpush1.msra.mxu0 0.0
      %1310 = vmatprep.subr.mxu0 0.0
      %1311 = vmatpush1.msra.mxu0 0.0
      %1312 = vmatprep.mubr.f32.mxu0 0.0
      %1313 = vmatmul.mubr.f32.gmra.mrb[0].mxu0 %v1201
      %v1314 = vpop.f32.mrb[0].mxu0
      %v1315 = vadd.f32 %v1198, %v1314
      %v1316 = vpop.f32.mrb[0].mxu0
      %1317 = vmatprep.mubr.f32.mxu0 0.0
      %1318 = vmatmul.mubr.f32.gmra.mrb[0].mxu0 %v1204
      %v1319 = vpop.f32.mrb[0].mxu0
      %v1320 = vadd.f32 %v1198, %v1319
      %v1321 = vpop.f32.mrb[0].mxu0
      %1322 = vmatprep.mubr.f32.mxu0 0.0
      %1323 = vmatmul.mubr.f32.gmra.mrb[0].mxu0 %v1207
      %v1324 = vpop.f32.mrb[0].mxu0
      %v1325 = vadd.f32 %v1198, %v1324
      %v1326 = vpop.f32.mrb[0].mxu0
      %1327 = vmatprep.mubr.f32.mxu0 0.0
      %1328 = vmatmul.mubr.f32.gmra.mrb[0].mxu0 %v1210
      %v1329 = vpop.f32.mrb[0].mxu0
      %v1330 = vadd.f32 %v1198, %v1329
      %v1331 = vpop.f32.mrb[0].mxu0
      %1332 = vmatprep.mubr.f32.mxu0 0.0
      %1333 = vmatmul.mubr.f32.gmra.mrb[0].mxu0 %v1213
      %v1334 = vpop.f32.mrb[0].mxu0
      %v1335 = vadd.f32 %v1198, %v1334
      %v1336 = vpop.f32.mrb[0].mxu0
      %1337 = vmatprep.mubr.f32.mxu0 0.0
      %1338 = vmatmul.mubr.f32.gmra.mrb[0].mxu0 %v1216
      %v1339 = vpop.f32.mrb[0].mxu0
      %v1340 = vadd.f32 %v1198, %v1339
      %v1341 = vpop.f32.mrb[0].mxu0
      %1342 = vmatprep.mubr.f32.mxu0 0.0
      %1343 = vmatmul.mubr.f32.gmra.mrb[0].mxu0 %v1219
      %v1344 = vpop.f32.mrb[0].mxu0
      %v1345 = vadd.f32 %v1198, %v1344
      %v1346 = vpop.f32.mrb[0].mxu0
      %1347 = vmatprep.mubr.f32.mxu0 0.0
      %1348 = vmatmul.mubr.f32.gmra.mrb[0].mxu0 %v1222
      %v1349 = vpop.f32.mrb[0].mxu0
      %v1350 = vadd.f32 %v1198, %v1349
      %v1351 = vpop.f32.mrb[0].mxu0
      %1352 = vmatprep.mubr.f32.mxu0 0.0
      %1353 = vmatmul.mubr.f32.gmra.mrb[0].mxu0 %v1225
      %v1354 = vpop.f32.mrb[0].mxu0
      %v1355 = vadd.f32 %v1198, %v1354
      %v1356 = vpop.f32.mrb[0].mxu0
      %1357 = vmatprep.mubr.f32.mxu0 0.0
      %1358 = vmatmul.mubr.f32.gmra.mrb[0].mxu0 %v1228
      %v1359 = vpop.f32.mrb[0].mxu0
      %v1360 = vadd.f32 %v1198, %v1359
      %v1361 = vpop.f32.mrb[0].mxu0
      %1362 = vmatprep.mubr.f32.mxu0 0.0
      %1363 = vmatmul.mubr.f32.gmra.mrb[0].mxu0 %v1231
      %v1364 = vpop.f32.mrb[0].mxu0
      %v1365 = vadd.f32 %v1198, %v1364
      %v1366 = vpop.f32.mrb[0].mxu0
      %1367 = vmatprep.mubr.f32.mxu0 0.0
      %1368 = vmatmul.mubr.f32.gmra.mrb[0].mxu0 %v1234
      %v1369 = vpop.f32.mrb[0].mxu0
      %v1370 = vadd.f32 %v1198, %v1369
      %v1371 = vpop.f32.mrb[0].mxu0
      %1372 = vmatprep.mubr.f32.mxu0 0.0
      %1373 = vmatmul.mubr.f32.gmra.mrb[0].mxu0 %v1237
      %v1374 = vpop.f32.mrb[0].mxu0
      %v1375 = vadd.f32 %v1198, %v1374
      %v1376 = vpop.f32.mrb[0].mxu0
      %1377 = vmatprep.mubr.f32.mxu0 0.0
      %1378 = vmatmul.mubr.f32.gmra.mrb[0].mxu0 %v1240
      %v1379 = vpop.f32.mrb[0].mxu0
      %v1380 = vadd.f32 %v1198, %v1379
      %v1381 = vpop.f32.mrb[0].mxu0
      %1382 = vmatprep.mubr.f32.mxu0 0.0
      %1383 = vmatmul.mubr.f32.gmra.mrb[0].mxu0 %v1243
      %v1384 = vpop.f32.mrb[0].mxu0
      %v1385 = vadd.f32 %v1198, %v1384
      %v1386 = vpop.f32.mrb[0].mxu0
      %1387 = vmatprep.mubr.f32.mxu0 0.0
      %1388 = vmatmul.mubr.f32.gmra.mrb[0].mxu0 %v1246
      %v1389 = vpop.f32.mrb[0].mxu0
      %v1390 = vadd.f32 %v1198, %v1389
      %v1391 = vpop.f32.mrb[0].mxu0
      %1392 = vdwg.mxu0
      %s1393 = sadd.s32 %s302, 16
      %s1394 = scalar_lea.vmem %s291, %s1393
      %v1395 = vld [vmem:[%s1394] sm:$0xff]
      %v1396 = vld [vmem:[%s1394 + $0x8] sm:$0xff]
      %v1397 = vld [vmem:[%s1394 + $0x10] sm:$0xff]
      %v1398 = vld [vmem:[%s1394 + $0x18] sm:$0xff]
      %v1399 = vld [vmem:[%s1394 + $0x20] sm:$0xff]
      %v1400 = vld [vmem:[%s1394 + $0x28] sm:$0xff]
      %v1401 = vld [vmem:[%s1394 + $0x30] sm:$0xff]
      %v1402 = vld [vmem:[%s1394 + $0x38] sm:$0xff]
      %v1403 = vld [vmem:[%s1394 + $0x40] sm:$0xff]
      %v1404 = vld [vmem:[%s1394 + $0x48] sm:$0xff]
      %v1405 = vld [vmem:[%s1394 + $0x50] sm:$0xff]
      %v1406 = vld [vmem:[%s1394 + $0x58] sm:$0xff]
      %v1407 = vld [vmem:[%s1394 + $0x60] sm:$0xff]
      %v1408 = vld [vmem:[%s1394 + $0x68] sm:$0xff]
      %v1409 = vld [vmem:[%s1394 + $0x70] sm:$0xff]
      %v1410 = vld [vmem:[%s1394 + $0x78] sm:$0xff]
      %v1411 = vadd.f32 %v1315, %v1395
      %v1412 = vadd.f32 %v1320, %v1396
      %v1413 = vadd.f32 %v1325, %v1397
      %v1414 = vadd.f32 %v1330, %v1398
      %v1415 = vadd.f32 %v1335, %v1399
      %v1416 = vadd.f32 %v1340, %v1400
      %v1417 = vadd.f32 %v1345, %v1401
      %v1418 = vadd.f32 %v1350, %v1402
      %v1419 = vadd.f32 %v1355, %v1403
      %v1420 = vadd.f32 %v1360, %v1404
      %v1421 = vadd.f32 %v1365, %v1405
      %v1422 = vadd.f32 %v1370, %v1406
      %v1423 = vadd.f32 %v1375, %v1407
      %v1424 = vadd.f32 %v1380, %v1408
      %v1425 = vadd.f32 %v1385, %v1409
      %v1426 = vadd.f32 %v1390, %v1410
      %1427 = vst.msk [vmem:[%s300] sm:$0xff] %vm332, %v1411
      %1428 = vst.msk [vmem:[%s300 + $0x8] sm:$0xff] %vm332, %v1412
      %1429 = vst.msk [vmem:[%s300 + $0x10] sm:$0xff] %vm332, %v1413
      %1430 = vst.msk [vmem:[%s300 + $0x18] sm:$0xff] %vm332, %v1414
      %1431 = vst.msk [vmem:[%s300 + $0x20] sm:$0xff] %vm332, %v1415
      %1432 = vst.msk [vmem:[%s300 + $0x28] sm:$0xff] %vm332, %v1416
      %1433 = vst.msk [vmem:[%s300 + $0x30] sm:$0xff] %vm332, %v1417
      %1434 = vst.msk [vmem:[%s300 + $0x38] sm:$0xff] %vm332, %v1418
      %1435 = vst.msk [vmem:[%s300 + $0x40] sm:$0xff] %vm332, %v1419
      %1436 = vst.msk [vmem:[%s300 + $0x48] sm:$0xff] %vm332, %v1420
      %1437 = vst.msk [vmem:[%s300 + $0x50] sm:$0xff] %vm332, %v1421
      %1438 = vst.msk [vmem:[%s300 + $0x58] sm:$0xff] %vm332, %v1422
      %1439 = vst.msk [vmem:[%s300 + $0x60] sm:$0xff] %vm332, %v1423
      %1440 = vst.msk [vmem:[%s300 + $0x68] sm:$0xff] %vm332, %v1424
      %1441 = vst.msk [vmem:[%s300 + $0x70] sm:$0xff] %vm332, %v1425
      %1442 = vst.msk [vmem:[%s300 + $0x78] sm:$0xff] %vm332, %v1426
      %s1443 = smul.u32 16, %s23
      %p1444 = scmp.lt.s32.totalorder %s22, 1
      %s1445 = scalar_select %p1444, %s22, 1
      %p1446 = scmp.lt.s32.totalorder %s1443, 31
      %s1447 = scalar_select %p1446, %s1443, 31
      %s1448 = smul.addr %s1445, 32
      %s1449 = sadd.s32 %s1447, %s1448
      %s1450 = smul.addr %s1449, 8
      %s1451 = scalar_lea.vmem %s7, %s1450
      // Predicated region
      $region57: #{tpu_custom_call.1} parent=47 // pred_check
        %p1452 = pneg %p202
      $region58: #{tpu_custom_call.1} parent=47 // pred_check_branch
        %1454 = sbr.rel (%p1452) target = $region60
      $region59: #{tpu_custom_call.1} parent=47 // pred_region
        %s1455 = smul.u32 16, %s23
      $region60: #{tpu_custom_call.1} parent=47 // pred_fallthru
        _
    $region48: #{tpu_custom_call.1} parent=5 // pred_fallthru
      _
    %p1456 = scmp.le.s32.totalorder 2, %s13
    // Predicated region
    $region61: #{tpu_custom_call.1} parent=5 // pred_check
      %p1457 = pneg %p1456
    $region62: #{tpu_custom_call.1} parent=5 // pred_check_branch
      %1459 = sbr.rel (%p1457) target = $region64
    $region63: #{tpu_custom_call.1} parent=5 // pred_region
      %s1460 = ssub.s32 %s13, 2
      // Predicated region
      $region65: #{tpu_custom_call.1} parent=63 // pred_check
        %p1461 = pneg %p208
      $region66: #{tpu_custom_call.1} parent=63 // pred_check_branch
        %1463 = sbr.rel (%p1461) target = $region68
      $region67: #{tpu_custom_call.1} parent=63 // pred_region
        %s1464 = smul.u32 16, %s25
        %p1465 = scmp.lt.s32.totalorder %s24, 1
        %s1466 = scalar_select %p1465, %s24, 1
        %p1467 = scmp.lt.s32.totalorder %s1464, 31
        %s1468 = scalar_select %p1467, %s1464, 31
        %s1469 = smul.addr %s1466, 32
        %s1470 = sadd.s32 %s1468, %s1469
        %s1471 = smul.addr %s1470, 8
        %s1472 = scalar_lea.vmem %s7, %s1471
      $region68: #{tpu_custom_call.1} parent=63 // pred_fallthru
        _
    $region64: #{tpu_custom_call.1} parent=5 // pred_fallthru
      _
  $region6: #{tpu_custom_call.1} parent=0 // loop_footer
    %s17 = sadd.s32 1, %s13
  $region7: #{tpu_custom_call.1} parent=0 // loop_footer_branch
    %12 = sbr.rel target = $region3
  $region8: #{tpu_custom_call.1} parent=0 // loop_exit
    _

</llo_original>
